<compile_context>
chip_gen: v6e
topology: v6e:2x2x1
jax: 0.10.0
libtpu: 0.0.40
codegen_flags: <defaults>
</compile_context>

<pallas_src>
import functools

import jax
import jax.numpy as jnp
from jax.experimental import pallas as pl
from jax.experimental.pallas import tpu as pltpu

N_ATOM_FEATURES = 28


def pka_kernel(x_ref, mask_ref, w_emb_ref,
               wcat_ref, bcat_ref, gwx_ref, gwh_ref, gb_ref,
               fcw0_ref, fcb0_ref, fcwm_ref, fcbm_ref, fcwl_ref, fcbl_ref,
               out_ref):
    """Forward pass for one tile of molecules.

    x_ref holds a (rows, Fin) bf16 block of node features (rows = batch_tile * N nodes
    flattened) so every per-node linear layer runs as a single MXU GEMM over all rows.
    The per-molecule (N, N) attention is computed as one block-diagonal masked
    (rows, rows) attention per tile (mask_ref is the additive block-diagonal mask).
    """
    bf16 = jnp.bfloat16

    # --- embedding (Linear, no bias): bf16 operands / f32 accumulation ---
    x = jnp.dot(x_ref[...], w_emb_ref[...], preferred_element_type=jnp.float32)   # (rows, D)
    d = x.shape[-1]

    # Additive block-diagonal mask, loaded once per tile (hoisted out of the layer loop).
    block_mask = mask_ref[...]                                                     # (rows, rows)

    # --- stacked GAT_gate layers (static unroll over layers) ---
    n_gat = wcat_ref.shape[0]
    for l in range(n_gat):
        x16 = x.astype(bf16)
        # Fused W_g / A_g GEMM:  hh[:, :D] = x@W + b,   hh[:, D:] = (x@W + b)@A
        hh = jnp.dot(x16, wcat_ref[l], preferred_element_type=jnp.float32) + bcat_ref[l]
        h16 = hh[:, :d].astype(bf16)                                               # (rows, D)
        hA16 = hh[:, d:].astype(bf16)                                              # (rows, D)

        # e[i, j] = <hA[i], h[j]>, symmetrized, block-diagonal masked (large negative
        # off-block so cross-molecule attention underflows to exactly 0 after exp).
        e = jax.lax.dot_general(hA16, h16, (((1,), (1,)), ((), ())),
                                preferred_element_type=jnp.float32)               # (rows, rows)
        e = e + e.T + block_mask
        # torch softmax(dim=1) is a column softmax; every unmasked block is symmetric so
        # the lane-native row softmax is exactly its transpose.  EUP approx recip for denom.
        m = jnp.max(e, axis=-1, keepdims=True)
        p = jnp.exp(e - m)
        s = jnp.sum(p, axis=-1, keepdims=True)
        att = p * pl.reciprocal(s, approx=True)                                    # = att_torch^T
        # h' = att_torch @ h == att^T @ h : contract over axis 0, no explicit transpose.
        hp = jax.lax.dot_general(att.astype(bf16), h16, (((0,), (0,)), ((), ())),
                                 preferred_element_type=jnp.float32)               # (rows, D)
        h_prime = jnp.maximum(hp, 0.0)

        # gate([x, h']) as a VPU multiply + lane reduce (no width-1 MXU matmul).
        gate_logit = (jnp.sum(x * gwx_ref[l] + h_prime * gwh_ref[l],
                              axis=-1, keepdims=True) + gb_ref[l])                 # (rows, 1)
        coeff = jax.nn.sigmoid(gate_logit)
        x = coeff * x + (1.0 - coeff) * h_prime

    # --- FC head (eval mode: dropout is identity) ---
    y = jnp.maximum(
        jnp.dot(x.astype(bf16), fcw0_ref[...], preferred_element_type=jnp.float32)
        + fcb0_ref[...], 0.0)
    for i in range(fcwm_ref.shape[0]):
        y = jnp.maximum(
            jnp.dot(y.astype(bf16), fcwm_ref[i], preferred_element_type=jnp.float32)
            + fcbm_ref[i], 0.0)
    # Final (H -> 1) projection emitted directly as a lane-dense (1, rows) row.
    out_row = jax.lax.dot_general(fcwl_ref[...], y.astype(bf16),
                                  (((1,), (1,)), ((), ())),
                                  preferred_element_type=jnp.float32)               # (1, rows)
    out_ref[...] = out_row + fcbl_ref[...]


def _const_spec(shape):
    """Full-array block with a constant index map (weights, resident across the grid)."""
    nd = len(shape)
    return pl.BlockSpec(shape, lambda b, _nd=nd: (0,) * _nd)
    # TODO(synk): at production widths (D >= 512) add pipeline_mode=pl.Buffered(1) here so
    # constant weights are single-buffered (matters on v7x's 64 MiB VMEM); noise at D=32.


@functools.partial(jax.jit, static_argnames=("batch_tile",))
def pka_forward(x, params, *, batch_tile=None):
    B, N, Fin = x.shape
    (w_emb, wg, bg, ag, gwx, gwh, gb,
     fcw0, fcb0, fcwm, fcbm, fcwl, fcbl) = params

    bf16 = jnp.bfloat16

    # Fuse W_g / A_g per layer (f32 product, one bf16 cast):
    #   h  = x @ W + b ;  hA = h @ A = x @ (W @ A) + b @ A
    wga = jnp.einsum('lde,lef->ldf', wg, ag)
    bga = jnp.einsum('lre,lef->lrf', bg, ag)
    wcat = jnp.concatenate([wg, wga], axis=-1).astype(bf16)      # (L, D, 2D) bf16
    bcat = jnp.concatenate([bg, bga], axis=-1)                   # (L, 1, 2D) f32

    w_emb_c = w_emb.astype(bf16)
    fcw0_c = fcw0.astype(bf16)
    fcwm_c = fcwm.astype(bf16)
    fcwl_c = fcwl.astype(bf16)

    # Batch tile: target ~256 rows per tile (fills the MXU M dim on v6e/v7x) while keeping
    # the grid >= 2 steps whenever B allows (v7x has 2 TensorCores; "parallel" only shards
    # the grid across them with >= 2 steps).  v5e/v6e are unaffected by the >=2 clamp.
    if batch_tile is None:
        bt = max(1, 256 // N)
        if B >= 2:
            bt = min(bt, -(-B // 2))
        bt = max(1, min(bt, B))
    else:
        bt = int(batch_tile)

    b_pad = -(-B // bt) * bt
    if b_pad != B:
        x = jnp.pad(x, ((0, b_pad - B), (0, 0), (0, 0)))
    num_tiles = b_pad // bt
    rows = bt * N

    # Flatten nodes and cast activations to bf16 in the wrapper (halves per-step DMA).
    x_flat = x.reshape(b_pad * N, Fin).astype(bf16)

    # Additive block-diagonal mask (one molecule per N-row block); large negative, not -inf.
    mol_id = jnp.arange(rows, dtype=jnp.int32) // N
    block_mask = jnp.where(mol_id[:, None] == mol_id[None, :],
                           0.0, -1e9).astype(jnp.float32)        # (rows, rows)

    in_specs = [
        pl.BlockSpec((rows, Fin), lambda b: (b, 0)),             # one batch tile of node rows
        _const_spec(block_mask.shape),
        _const_spec(w_emb_c.shape),
        _const_spec(wcat.shape), _const_spec(bcat.shape),
        _const_spec(gwx.shape), _const_spec(gwh.shape), _const_spec(gb.shape),
        _const_spec(fcw0_c.shape), _const_spec(fcb0.shape),
        _const_spec(fcwm_c.shape), _const_spec(fcbm.shape),
        _const_spec(fcwl_c.shape), _const_spec(fcbl.shape),
    ]
    # Lane-dense output: one (1, rows) row per grid step (leading tile dim squeezed).
    out_spec = pl.BlockSpec((None, 1, rows), lambda b: (b, 0, 0))

    out = pl.pallas_call(
        pka_kernel,
        grid=(num_tiles,),
        in_specs=in_specs,
        out_specs=out_spec,
        out_shape=jax.ShapeDtypeStruct((num_tiles, 1, rows), jnp.float32),
        compiler_params=pltpu.CompilerParams(
            dimension_semantics=("parallel",)),
    )(x_flat, block_mask, w_emb_c, wcat, bcat, gwx, gwh, gb,
      fcw0_c, fcb0, fcwm_c, fcbm, fcwl_c, fcbl)
    return out.reshape(b_pad, N)[:B, :, None]


def init_params(key, *, d_graph_layer, n_graph_layer, d_fc_layer, n_fc_layer):
    """Deterministic synthetic parameters; weights stored in (in, out) orientation."""
    Fin = 2 * N_ATOM_FEATURES
    D, L, H = d_graph_layer, n_graph_layer, d_fc_layer
    ks = jax.random.split(key, 16)
    s = 0.1
    w_emb = s * jax.random.normal(ks[0], (Fin, D), jnp.float32)
    wg = s * jax.random.normal(ks[1], (L, D, D), jnp.float32)
    bg = s * jax.random.normal(ks[2], (L, 1, D), jnp.float32)
    ag = s * jax.random.normal(ks[3], (L, D, D), jnp.float32)
    gwx = s * jax.random.normal(ks[4], (L, 1, D), jnp.float32)   # gate weight on x   (row vec)
    gwh = s * jax.random.normal(ks[5], (L, 1, D), jnp.float32)   # gate weight on h'  (row vec)
    gb = s * jax.random.normal(ks[6], (L, 1, 1), jnp.float32)
    fcw0 = s * jax.random.normal(ks[7], (D, H), jnp.float32)
    fcb0 = s * jax.random.normal(ks[8], (1, H), jnp.float32)
    n_mid = max(n_fc_layer - 2, 1)
    fcwm = s * jax.random.normal(ks[9], (n_mid, H, H), jnp.float32)
    fcbm = s * jax.random.normal(ks[10], (n_mid, 1, H), jnp.float32)
    fcwl = s * jax.random.normal(ks[11], (1, H), jnp.float32)    # final (H -> 1) as a row vec
    fcbl = s * jax.random.normal(ks[12], (1, 1), jnp.float32)
    return (w_emb, wg, bg, ag, gwx, gwh, gb, fcw0, fcb0, fcwm, fcbm, fcwl, fcbl)


def pka_reference_f32(x, params):
    """Pure-JAX float32 reference matching the module semantics (eval mode)."""
    (w_emb, wg, bg, ag, gwx, gwh, gb, fcw0, fcb0, fcwm, fcbm, fcwl, fcbl) = params
    x = jnp.einsum('bnf,fd->bnd', x, w_emb)
    for l in range(wg.shape[0]):
        h = jnp.einsum('bnd,de->bne', x, wg[l]) + bg[l]
        e = jnp.einsum('bnd,bmd->bnm', jnp.einsum('bnd,de->bne', h, ag[l]), h)
        e = e + jnp.swapaxes(e, 1, 2)
        att = jax.nn.softmax(e, axis=1)          # torch dim=1
        hp = jax.nn.relu(jnp.einsum('bnm,bmd->bnd', att, h))
        gate = jax.nn.sigmoid(jnp.sum(x * gwx[l] + hp * gwh[l], axis=-1, keepdims=True) + gb[l])
        x = gate * x + (1.0 - gate) * hp
    y = jax.nn.relu(jnp.einsum('bnd,dh->bnh', x, fcw0) + fcb0)
    for i in range(fcwm.shape[0]):
        y = jax.nn.relu(jnp.einsum('bnh,hk->bnk', y, fcwm[i]) + fcbm[i])
    return jnp.sum(y * fcwl, axis=-1, keepdims=True) + fcbl[0, 0]


def pka_reference_mixed(x, params):
    """Pure-JAX reference mirroring the kernel's bf16-operand / f32-accumulate matmuls,
    including the fused W@A path (only the approx softmax reciprocal differs)."""
    (w_emb, wg, bg, ag, gwx, gwh, gb, fcw0, fcb0, fcwm, fcbm, fcwl, fcbl) = params
    bf = jnp.bfloat16
    wga = jnp.einsum('lde,lef->ldf', wg, ag)
    bga = jnp.einsum('lre,lef->lrf', bg, ag)

    def mm(a, w):
        return jnp.einsum('...ij,jk->...ik', a.astype(bf), w.astype(bf),
                          preferred_element_type=jnp.float32)

    x = mm(x, w_emb)
    for l in range(wg.shape[0]):
        h = mm(x, wg[l]) + bg[l]
        hA = mm(x, wga[l]) + bga[l]
        e = jnp.einsum('bnd,bmd->bnm', hA.astype(bf), h.astype(bf),
                       preferred_element_type=jnp.float32)
        e = e + jnp.swapaxes(e, 1, 2)
        att = jax.nn.softmax(e, axis=1)
        hp = jax.nn.relu(jnp.einsum('bnm,bmd->bnd', att.astype(bf), h.astype(bf),
                                    preferred_element_type=jnp.float32))
        gate = jax.nn.sigmoid(jnp.sum(x * gwx[l] + hp * gwh[l], axis=-1, keepdims=True) + gb[l])
        x = gate * x + (1.0 - gate) * hp
    y = jax.nn.relu(mm(x, fcw0) + fcb0)
    for i in range(fcwm.shape[0]):
        y = jax.nn.relu(mm(y, fcwm[i]) + fcbm[i])
    out = jnp.einsum('bnh,kh->bnk', y.astype(bf), fcwl.astype(bf),
                     preferred_element_type=jnp.float32) + fcbl[0, 0]
    return out


if __name__ == "__main__":
    # Small shapes consistent with the module (constructor args shrunk for test).
    B, N = 2, 16                    # batch of molecules, nodes per molecule
    D_GRAPH, N_GRAPH = 32, 2        # d_graph_layer, n_graph_layer
    D_FC, N_FC = 32, 3              # d_FC_layer, n_FC_layer

    key = jax.random.PRNGKey(0)
    kx, kp = jax.random.split(key)
    x = jax.random.normal(kx, (B, N, 2 * N_ATOM_FEATURES), jnp.float32)
    params = init_params(kp, d_graph_layer=D_GRAPH, n_graph_layer=N_GRAPH,
                         d_fc_layer=D_FC, n_fc_layer=N_FC)

    out = jax.block_until_ready(pka_forward(x, params))
    assert out.shape == (B, N, 1)

    ref_mixed = jax.block_until_ready(pka_reference_mixed(x, params))
    ref_f32 = jax.block_until_ready(pka_reference_f32(x, params))
    # Tight check vs. a reference with the same bf16-operand matmuls / fused W@A path
    # (only the approx softmax reciprocal differs), loose check vs. the full-f32 module math.
    assert jnp.allclose(out, ref_mixed, atol=5e-3, rtol=5e-3), "kernel/mixed-ref mismatch"
    assert jnp.allclose(out, ref_f32, atol=3e-2, rtol=3e-2), "kernel/f32-ref mismatch"

    # TODO(synk): GAT_gate class is not defined in the given file; reconstructed the
    # standard adjacency-free GAT_gate (forward here is called with x only); dropout is
    # eval-mode identity and the unused mu/dev parameters are omitted.
    print("KERNEL_OK")
</pallas_src>

<mosaic_0001>
module attributes {stable_mosaic.version = 11 : i64} {
  func.func @pka_kernel(%arg0: i32, %arg1: memref<16x56xbf16, #tpu.memory_space<vmem>>, %arg2: memref<16x16xf32, #tpu.memory_space<vmem>>, %arg3: memref<56x32xbf16, #tpu.memory_space<vmem>>, %arg4: memref<2x32x64xbf16, #tpu.memory_space<vmem>>, %arg5: memref<2x1x64xf32, #tpu.memory_space<vmem>>, %arg6: memref<2x1x32xf32, #tpu.memory_space<vmem>>, %arg7: memref<2x1x32xf32, #tpu.memory_space<vmem>>, %arg8: memref<2x1x1xf32, #tpu.memory_space<vmem>>, %arg9: memref<32x32xbf16, #tpu.memory_space<vmem>>, %arg10: memref<1x32xf32, #tpu.memory_space<vmem>>, %arg11: memref<1x32x32xbf16, #tpu.memory_space<vmem>>, %arg12: memref<1x1x32xf32, #tpu.memory_space<vmem>>, %arg13: memref<1x32xbf16, #tpu.memory_space<vmem>>, %arg14: memref<1x1xf32, #tpu.memory_space<vmem>>, %arg15: memref<1x1x16xf32, #tpu.memory_space<vmem>>) attributes {dimension_semantics = [#tpu.dimension_semantics<parallel>], iteration_bounds = array<i64: 2>, scalar_prefetch = 0 : i64, scratch_operands = 0 : i64, tpu.core_type = #tpu.core_type<tc>, window_params = [{transform_indices = @transform_0, window_bounds = array<i64: 16, 56>}, {pipeline_mode = #tpu.pipeline_mode<synchronous>, transform_indices = @transform_1, window_bounds = array<i64: 16, 16>}, {pipeline_mode = #tpu.pipeline_mode<synchronous>, transform_indices = @transform_2, window_bounds = array<i64: 56, 32>}, {pipeline_mode = #tpu.pipeline_mode<synchronous>, transform_indices = @transform_3, window_bounds = array<i64: 2, 32, 64>}, {pipeline_mode = #tpu.pipeline_mode<synchronous>, transform_indices = @transform_4, window_bounds = array<i64: 2, 1, 64>}, {pipeline_mode = #tpu.pipeline_mode<synchronous>, transform_indices = @transform_5, window_bounds = array<i64: 2, 1, 32>}, {pipeline_mode = #tpu.pipeline_mode<synchronous>, transform_indices = @transform_6, window_bounds = array<i64: 2, 1, 32>}, {pipeline_mode = #tpu.pipeline_mode<synchronous>, transform_indices = @transform_7, window_bounds = array<i64: 2, 1, 1>}, {pipeline_mode = #tpu.pipeline_mode<synchronous>, transform_indices = @transform_8, window_bounds = array<i64: 32, 32>}, {pipeline_mode = #tpu.pipeline_mode<synchronous>, transform_indices = @transform_9, window_bounds = array<i64: 1, 32>}, {pipeline_mode = #tpu.pipeline_mode<synchronous>, transform_indices = @transform_10, window_bounds = array<i64: 1, 32, 32>}, {pipeline_mode = #tpu.pipeline_mode<synchronous>, transform_indices = @transform_11, window_bounds = array<i64: 1, 1, 32>}, {pipeline_mode = #tpu.pipeline_mode<synchronous>, transform_indices = @transform_12, window_bounds = array<i64: 1, 32>}, {pipeline_mode = #tpu.pipeline_mode<synchronous>, transform_indices = @transform_13, window_bounds = array<i64: 1, 1>}, {transform_indices = @transform_14, window_bounds = array<i64: 1, 1, 16>}]} {
    %c0 = arith.constant 0 : index
    %c0_0 = arith.constant 0 : index
    %0 = vector.load %arg1[%c0, %c0_0] : memref<16x56xbf16, #tpu.memory_space<vmem>>, vector<16x56xbf16>
    %c0_1 = arith.constant 0 : index
    %c0_2 = arith.constant 0 : index
    %1 = vector.load %arg3[%c0_1, %c0_2] : memref<56x32xbf16, #tpu.memory_space<vmem>>, vector<56x32xbf16>
    %cst = arith.constant dense<0.000000e+00> : vector<16x32xf32>
    %2 = tpu.matmul %0, %1, %cst {dimension_numbers = #tpu.dot_dimension_numbers<[1], [0], [0], [1], [0, 0, 1, 1], [], []>} : vector<16x56xbf16>, vector<56x32xbf16>, vector<16x32xf32> -> vector<16x32xf32>
    %c0_3 = arith.constant 0 : index
    %c0_4 = arith.constant 0 : index
    %3 = vector.load %arg2[%c0_3, %c0_4] : memref<16x16xf32, #tpu.memory_space<vmem>>, vector<16x16xf32>
    %4 = arith.truncf %2 : vector<16x32xf32> to vector<16x32xbf16>
    %c0_5 = arith.constant 0 : index
    %c0_6 = arith.constant 0 : index
    %c0_7 = arith.constant 0 : index
    %5 = vector.load %arg4[%c0_5, %c0_6, %c0_7] : memref<2x32x64xbf16, #tpu.memory_space<vmem>>, vector<1x32x64xbf16>
    %6 = vector.shape_cast %5 : vector<1x32x64xbf16> to vector<32x64xbf16>
    %cst_8 = arith.constant dense<0.000000e+00> : vector<16x64xf32>
    %7 = tpu.matmul %4, %6, %cst_8 {dimension_numbers = #tpu.dot_dimension_numbers<[1], [0], [0], [1], [0, 0, 1, 1], [], []>} : vector<16x32xbf16>, vector<32x64xbf16>, vector<16x64xf32> -> vector<16x64xf32>
    %c0_9 = arith.constant 0 : index
    %c0_10 = arith.constant 0 : index
    %c0_11 = arith.constant 0 : index
    %8 = vector.load %arg5[%c0_9, %c0_10, %c0_11] : memref<2x1x64xf32, #tpu.memory_space<vmem>>, vector<1x1x64xf32>
    %9 = vector.shape_cast %8 : vector<1x1x64xf32> to vector<1x64xf32>
    %10 = vector.broadcast %9 : vector<1x64xf32> to vector<16x64xf32>
    %11 = arith.addf %7, %10 : vector<16x64xf32>
    %12 = vector.extract_strided_slice %11 {offsets = [0, 0], sizes = [16, 32], strides = [1, 1]} : vector<16x64xf32> to vector<16x32xf32>
    %13 = arith.truncf %12 : vector<16x32xf32> to vector<16x32xbf16>
    %14 = vector.extract_strided_slice %11 {offsets = [0, 32], sizes = [16, 32], strides = [1, 1]} : vector<16x64xf32> to vector<16x32xf32>
    %15 = arith.truncf %14 : vector<16x32xf32> to vector<16x32xbf16>
    %cst_12 = arith.constant dense<0.000000e+00> : vector<16x16xf32>
    %16 = tpu.matmul %15, %13, %cst_12 {dimension_numbers = #tpu.dot_dimension_numbers<[1], [1], [0], [0], [0, 0, 1, 0], [], []>} : vector<16x32xbf16>, vector<16x32xbf16>, vector<16x16xf32> -> vector<16x16xf32>
    %17 = tpu.transpose %16, [1, 0] : vector<16x16xf32> -> vector<16x16xf32>
    %18 = arith.addf %16, %17 : vector<16x16xf32>
    %19 = arith.addf %18, %3 : vector<16x16xf32>
    %cst_13 = arith.constant dense<0xFF800000> : vector<16xf32>
    %20 = vector.multi_reduction <maximumf>, %19, %cst_13 [1] : vector<16x16xf32> to vector<16xf32>
    %21 = vector.shape_cast %20 : vector<16xf32> to vector<16x1xf32>
    %22 = vector.broadcast %21 : vector<16x1xf32> to vector<16x16xf32>
    %23 = arith.subf %19, %22 : vector<16x16xf32>
    %24 = math.exp %23 : vector<16x16xf32>
    %cst_14 = arith.constant dense<0.000000e+00> : vector<16xf32>
    %25 = vector.multi_reduction <add>, %24, %cst_14 [1] : vector<16x16xf32> to vector<16xf32>
    %26 = vector.shape_cast %25 : vector<16xf32> to vector<16x1xf32>
    %27 = tpu.reciprocal %26 {approx = true} : vector<16x1xf32> -> vector<16x1xf32>
    %28 = vector.broadcast %27 : vector<16x1xf32> to vector<16x16xf32>
    %29 = arith.mulf %24, %28 : vector<16x16xf32>
    %30 = arith.truncf %29 : vector<16x16xf32> to vector<16x16xbf16>
    %cst_15 = arith.constant dense<0.000000e+00> : vector<16x32xf32>
    %31 = tpu.matmul %30, %13, %cst_15 {dimension_numbers = #tpu.dot_dimension_numbers<[0], [0], [1], [1], [0, 1, 1, 1], [], []>} : vector<16x16xbf16>, vector<16x32xbf16>, vector<16x32xf32> -> vector<16x32xf32>
    %cst_16 = arith.constant 0.000000e+00 : f32
    %32 = vector.broadcast %cst_16 : f32 to vector<16x32xf32>
    %33 = arith.maximumf %31, %32 : vector<16x32xf32>
    %c0_17 = arith.constant 0 : index
    %c0_18 = arith.constant 0 : index
    %c0_19 = arith.constant 0 : index
    %34 = vector.load %arg6[%c0_17, %c0_18, %c0_19] : memref<2x1x32xf32, #tpu.memory_space<vmem>>, vector<1x1x32xf32>
    %35 = vector.shape_cast %34 : vector<1x1x32xf32> to vector<1x32xf32>
    %36 = vector.broadcast %35 : vector<1x32xf32> to vector<16x32xf32>
    %37 = arith.mulf %2, %36 : vector<16x32xf32>
    %c0_20 = arith.constant 0 : index
    %c0_21 = arith.constant 0 : index
    %c0_22 = arith.constant 0 : index
    %38 = vector.load %arg7[%c0_20, %c0_21, %c0_22] : memref<2x1x32xf32, #tpu.memory_space<vmem>>, vector<1x1x32xf32>
    %39 = vector.shape_cast %38 : vector<1x1x32xf32> to vector<1x32xf32>
    %40 = vector.broadcast %39 : vector<1x32xf32> to vector<16x32xf32>
    %41 = arith.mulf %33, %40 : vector<16x32xf32>
    %42 = arith.addf %37, %41 : vector<16x32xf32>
    %cst_23 = arith.constant dense<0.000000e+00> : vector<16xf32>
    %43 = vector.multi_reduction <add>, %42, %cst_23 [1] : vector<16x32xf32> to vector<16xf32>
    %44 = vector.shape_cast %43 : vector<16xf32> to vector<16x1xf32>
    %c0_24 = arith.constant 0 : index
    %c0_25 = arith.constant 0 : index
    %c0_26 = arith.constant 0 : index
    %45 = vector.load %arg8[%c0_24, %c0_25, %c0_26] : memref<2x1x1xf32, #tpu.memory_space<vmem>>, vector<1x1x1xf32>
    %46 = vector.shape_cast %45 : vector<1x1x1xf32> to vector<1x1xf32>
    %47 = vector.broadcast %46 : vector<1x1xf32> to vector<16x1xf32>
    %48 = arith.addf %44, %47 : vector<16x1xf32>
    %49 = arith.negf %48 : vector<16x1xf32>
    %50 = math.exp %49 : vector<16x1xf32>
    %cst_27 = arith.constant 1.000000e+00 : f32
    %51 = vector.broadcast %cst_27 : f32 to vector<16x1xf32>
    %52 = arith.addf %51, %50 : vector<16x1xf32>
    %53 = arith.divf %51, %52 : vector<16x1xf32>
    %54 = vector.broadcast %53 : vector<16x1xf32> to vector<16x32xf32>
    %55 = arith.mulf %54, %2 : vector<16x32xf32>
    %cst_28 = arith.constant 1.000000e+00 : f32
    %56 = vector.broadcast %cst_28 : f32 to vector<16x1xf32>
    %57 = arith.subf %56, %53 : vector<16x1xf32>
    %58 = vector.broadcast %57 : vector<16x1xf32> to vector<16x32xf32>
    %59 = arith.mulf %58, %33 : vector<16x32xf32>
    %60 = arith.addf %55, %59 : vector<16x32xf32>
    %61 = arith.truncf %60 : vector<16x32xf32> to vector<16x32xbf16>
    %c1 = arith.constant 1 : index
    %c0_29 = arith.constant 0 : index
    %c0_30 = arith.constant 0 : index
    %62 = vector.load %arg4[%c1, %c0_29, %c0_30] : memref<2x32x64xbf16, #tpu.memory_space<vmem>>, vector<1x32x64xbf16>
    %63 = vector.shape_cast %62 : vector<1x32x64xbf16> to vector<32x64xbf16>
    %cst_31 = arith.constant dense<0.000000e+00> : vector<16x64xf32>
    %64 = tpu.matmul %61, %63, %cst_31 {dimension_numbers = #tpu.dot_dimension_numbers<[1], [0], [0], [1], [0, 0, 1, 1], [], []>} : vector<16x32xbf16>, vector<32x64xbf16>, vector<16x64xf32> -> vector<16x64xf32>
    %c1_32 = arith.constant 1 : index
    %c0_33 = arith.constant 0 : index
    %c0_34 = arith.constant 0 : index
    %65 = vector.load %arg5[%c1_32, %c0_33, %c0_34] : memref<2x1x64xf32, #tpu.memory_space<vmem>>, vector<1x1x64xf32>
    %66 = vector.shape_cast %65 : vector<1x1x64xf32> to vector<1x64xf32>
    %67 = vector.broadcast %66 : vector<1x64xf32> to vector<16x64xf32>
    %68 = arith.addf %64, %67 : vector<16x64xf32>
    %69 = vector.extract_strided_slice %68 {offsets = [0, 0], sizes = [16, 32], strides = [1, 1]} : vector<16x64xf32> to vector<16x32xf32>
    %70 = arith.truncf %69 : vector<16x32xf32> to vector<16x32xbf16>
    %71 = vector.extract_strided_slice %68 {offsets = [0, 32], sizes = [16, 32], strides = [1, 1]} : vector<16x64xf32> to vector<16x32xf32>
    %72 = arith.truncf %71 : vector<16x32xf32> to vector<16x32xbf16>
    %cst_35 = arith.constant dense<0.000000e+00> : vector<16x16xf32>
    %73 = tpu.matmul %72, %70, %cst_35 {dimension_numbers = #tpu.dot_dimension_numbers<[1], [1], [0], [0], [0, 0, 1, 0], [], []>} : vector<16x32xbf16>, vector<16x32xbf16>, vector<16x16xf32> -> vector<16x16xf32>
    %74 = tpu.transpose %73, [1, 0] : vector<16x16xf32> -> vector<16x16xf32>
    %75 = arith.addf %73, %74 : vector<16x16xf32>
    %76 = arith.addf %75, %3 : vector<16x16xf32>
    %cst_36 = arith.constant dense<0xFF800000> : vector<16xf32>
    %77 = vector.multi_reduction <maximumf>, %76, %cst_36 [1] : vector<16x16xf32> to vector<16xf32>
    %78 = vector.shape_cast %77 : vector<16xf32> to vector<16x1xf32>
    %79 = vector.broadcast %78 : vector<16x1xf32> to vector<16x16xf32>
    %80 = arith.subf %76, %79 : vector<16x16xf32>
    %81 = math.exp %80 : vector<16x16xf32>
    %cst_37 = arith.constant dense<0.000000e+00> : vector<16xf32>
    %82 = vector.multi_reduction <add>, %81, %cst_37 [1] : vector<16x16xf32> to vector<16xf32>
    %83 = vector.shape_cast %82 : vector<16xf32> to vector<16x1xf32>
    %84 = tpu.reciprocal %83 {approx = true} : vector<16x1xf32> -> vector<16x1xf32>
    %85 = vector.broadcast %84 : vector<16x1xf32> to vector<16x16xf32>
    %86 = arith.mulf %81, %85 : vector<16x16xf32>
    %87 = arith.truncf %86 : vector<16x16xf32> to vector<16x16xbf16>
    %cst_38 = arith.constant dense<0.000000e+00> : vector<16x32xf32>
    %88 = tpu.matmul %87, %70, %cst_38 {dimension_numbers = #tpu.dot_dimension_numbers<[0], [0], [1], [1], [0, 1, 1, 1], [], []>} : vector<16x16xbf16>, vector<16x32xbf16>, vector<16x32xf32> -> vector<16x32xf32>
    %cst_39 = arith.constant 0.000000e+00 : f32
    %89 = vector.broadcast %cst_39 : f32 to vector<16x32xf32>
    %90 = arith.maximumf %88, %89 : vector<16x32xf32>
    %c1_40 = arith.constant 1 : index
    %c0_41 = arith.constant 0 : index
    %c0_42 = arith.constant 0 : index
    %91 = vector.load %arg6[%c1_40, %c0_41, %c0_42] : memref<2x1x32xf32, #tpu.memory_space<vmem>>, vector<1x1x32xf32>
    %92 = vector.shape_cast %91 : vector<1x1x32xf32> to vector<1x32xf32>
    %93 = vector.broadcast %92 : vector<1x32xf32> to vector<16x32xf32>
    %94 = arith.mulf %60, %93 : vector<16x32xf32>
    %c1_43 = arith.constant 1 : index
    %c0_44 = arith.constant 0 : index
    %c0_45 = arith.constant 0 : index
    %95 = vector.load %arg7[%c1_43, %c0_44, %c0_45] : memref<2x1x32xf32, #tpu.memory_space<vmem>>, vector<1x1x32xf32>
    %96 = vector.shape_cast %95 : vector<1x1x32xf32> to vector<1x32xf32>
    %97 = vector.broadcast %96 : vector<1x32xf32> to vector<16x32xf32>
    %98 = arith.mulf %90, %97 : vector<16x32xf32>
    %99 = arith.addf %94, %98 : vector<16x32xf32>
    %cst_46 = arith.constant dense<0.000000e+00> : vector<16xf32>
    %100 = vector.multi_reduction <add>, %99, %cst_46 [1] : vector<16x32xf32> to vector<16xf32>
    %101 = vector.shape_cast %100 : vector<16xf32> to vector<16x1xf32>
    %c1_47 = arith.constant 1 : index
    %c0_48 = arith.constant 0 : index
    %c0_49 = arith.constant 0 : index
    %102 = vector.load %arg8[%c1_47, %c0_48, %c0_49] : memref<2x1x1xf32, #tpu.memory_space<vmem>>, vector<1x1x1xf32>
    %103 = vector.shape_cast %102 : vector<1x1x1xf32> to vector<1x1xf32>
    %104 = vector.broadcast %103 : vector<1x1xf32> to vector<16x1xf32>
    %105 = arith.addf %101, %104 : vector<16x1xf32>
    %106 = arith.negf %105 : vector<16x1xf32>
    %107 = math.exp %106 : vector<16x1xf32>
    %cst_50 = arith.constant 1.000000e+00 : f32
    %108 = vector.broadcast %cst_50 : f32 to vector<16x1xf32>
    %109 = arith.addf %108, %107 : vector<16x1xf32>
    %110 = arith.divf %108, %109 : vector<16x1xf32>
    %111 = vector.broadcast %110 : vector<16x1xf32> to vector<16x32xf32>
    %112 = arith.mulf %111, %60 : vector<16x32xf32>
    %cst_51 = arith.constant 1.000000e+00 : f32
    %113 = vector.broadcast %cst_51 : f32 to vector<16x1xf32>
    %114 = arith.subf %113, %110 : vector<16x1xf32>
    %115 = vector.broadcast %114 : vector<16x1xf32> to vector<16x32xf32>
    %116 = arith.mulf %115, %90 : vector<16x32xf32>
    %117 = arith.addf %112, %116 : vector<16x32xf32>
    %118 = arith.truncf %117 : vector<16x32xf32> to vector<16x32xbf16>
    %c0_52 = arith.constant 0 : index
    %c0_53 = arith.constant 0 : index
    %119 = vector.load %arg9[%c0_52, %c0_53] : memref<32x32xbf16, #tpu.memory_space<vmem>>, vector<32x32xbf16>
    %cst_54 = arith.constant dense<0.000000e+00> : vector<16x32xf32>
    %120 = tpu.matmul %118, %119, %cst_54 {dimension_numbers = #tpu.dot_dimension_numbers<[1], [0], [0], [1], [0, 0, 1, 1], [], []>} : vector<16x32xbf16>, vector<32x32xbf16>, vector<16x32xf32> -> vector<16x32xf32>
    %c0_55 = arith.constant 0 : index
    %c0_56 = arith.constant 0 : index
    %121 = vector.load %arg10[%c0_55, %c0_56] : memref<1x32xf32, #tpu.memory_space<vmem>>, vector<1x32xf32>
    %122 = vector.broadcast %121 : vector<1x32xf32> to vector<16x32xf32>
    %123 = arith.addf %120, %122 : vector<16x32xf32>
    %cst_57 = arith.constant 0.000000e+00 : f32
    %124 = vector.broadcast %cst_57 : f32 to vector<16x32xf32>
    %125 = arith.maximumf %123, %124 : vector<16x32xf32>
    %126 = arith.truncf %125 : vector<16x32xf32> to vector<16x32xbf16>
    %c0_58 = arith.constant 0 : index
    %c0_59 = arith.constant 0 : index
    %c0_60 = arith.constant 0 : index
    %127 = vector.load %arg11[%c0_58, %c0_59, %c0_60] : memref<1x32x32xbf16, #tpu.memory_space<vmem>>, vector<1x32x32xbf16>
    %128 = vector.shape_cast %127 : vector<1x32x32xbf16> to vector<32x32xbf16>
    %cst_61 = arith.constant dense<0.000000e+00> : vector<16x32xf32>
    %129 = tpu.matmul %126, %128, %cst_61 {dimension_numbers = #tpu.dot_dimension_numbers<[1], [0], [0], [1], [0, 0, 1, 1], [], []>} : vector<16x32xbf16>, vector<32x32xbf16>, vector<16x32xf32> -> vector<16x32xf32>
    %c0_62 = arith.constant 0 : index
    %c0_63 = arith.constant 0 : index
    %c0_64 = arith.constant 0 : index
    %130 = vector.load %arg12[%c0_62, %c0_63, %c0_64] : memref<1x1x32xf32, #tpu.memory_space<vmem>>, vector<1x1x32xf32>
    %131 = vector.shape_cast %130 : vector<1x1x32xf32> to vector<1x32xf32>
    %132 = vector.broadcast %131 : vector<1x32xf32> to vector<16x32xf32>
    %133 = arith.addf %129, %132 : vector<16x32xf32>
    %cst_65 = arith.constant 0.000000e+00 : f32
    %134 = vector.broadcast %cst_65 : f32 to vector<16x32xf32>
    %135 = arith.maximumf %133, %134 : vector<16x32xf32>
    %c0_66 = arith.constant 0 : index
    %c0_67 = arith.constant 0 : index
    %136 = vector.load %arg13[%c0_66, %c0_67] : memref<1x32xbf16, #tpu.memory_space<vmem>>, vector<1x32xbf16>
    %137 = arith.truncf %135 : vector<16x32xf32> to vector<16x32xbf16>
    %cst_68 = arith.constant dense<0.000000e+00> : vector<1x16xf32>
    %138 = tpu.matmul %136, %137, %cst_68 {dimension_numbers = #tpu.dot_dimension_numbers<[1], [1], [0], [0], [0, 0, 1, 0], [], []>} : vector<1x32xbf16>, vector<16x32xbf16>, vector<1x16xf32> -> vector<1x16xf32>
    %c0_69 = arith.constant 0 : index
    %c0_70 = arith.constant 0 : index
    %139 = vector.load %arg14[%c0_69, %c0_70] : memref<1x1xf32, #tpu.memory_space<vmem>>, vector<1x1xf32>
    %140 = vector.broadcast %139 : vector<1x1xf32> to vector<1x16xf32>
    %141 = arith.addf %138, %140 : vector<1x16xf32>
    %c0_71 = arith.constant 0 : index
    %c0_72 = arith.constant 0 : index
    %c0_73 = arith.constant 0 : index
    %142 = vector.load %arg15[%c0_71, %c0_72, %c0_73] : memref<1x1x16xf32, #tpu.memory_space<vmem>>, vector<1x1x16xf32>
    %143 = vector.shape_cast %142 : vector<1x1x16xf32> to vector<1x16xf32>
    %144 = vector.shape_cast %141 : vector<1x16xf32> to vector<1x1x16xf32>
    tpu.vector_store %arg15[%c0_71, %c0_72, %c0_73], %144 {strides = array<i32>} : memref<1x1x16xf32, #tpu.memory_space<vmem>>, vector<1x1x16xf32>,
    return
  }
  func.func @transform_0(%arg0: i32) -> (i32, i32) {
    %c0_i32 = arith.constant 0 : i32
    %c0_i32_0 = arith.constant 0 : i32
    return %arg0, %c0_i32 : i32, i32
  }
  func.func @transform_1(%arg0: i32) -> (i32, i32) {
    %c0_i32 = arith.constant 0 : i32
    %c0_i32_0 = arith.constant 0 : i32
    %c0_i32_1 = arith.constant 0 : i32
    return %c0_i32, %c0_i32_0 : i32, i32
  }
  func.func @transform_2(%arg0: i32) -> (i32, i32) {
    %c0_i32 = arith.constant 0 : i32
    %c0_i32_0 = arith.constant 0 : i32
    %c0_i32_1 = arith.constant 0 : i32
    return %c0_i32, %c0_i32_0 : i32, i32
  }
  func.func @transform_3(%arg0: i32) -> (i32, i32, i32) {
    %c0_i32 = arith.constant 0 : i32
    %c0_i32_0 = arith.constant 0 : i32
    %c0_i32_1 = arith.constant 0 : i32
    %c0_i32_2 = arith.constant 0 : i32
    return %c0_i32, %c0_i32_0, %c0_i32_1 : i32, i32, i32
  }
  func.func @transform_4(%arg0: i32) -> (i32, i32, i32) {
    %c0_i32 = arith.constant 0 : i32
    %c0_i32_0 = arith.constant 0 : i32
    %c0_i32_1 = arith.constant 0 : i32
    %c0_i32_2 = arith.constant 0 : i32
    return %c0_i32, %c0_i32_0, %c0_i32_1 : i32, i32, i32
  }
  func.func @transform_5(%arg0: i32) -> (i32, i32, i32) {
    %c0_i32 = arith.constant 0 : i32
    %c0_i32_0 = arith.constant 0 : i32
    %c0_i32_1 = arith.constant 0 : i32
    %c0_i32_2 = arith.constant 0 : i32
    return %c0_i32, %c0_i32_0, %c0_i32_1 : i32, i32, i32
  }
  func.func @transform_6(%arg0: i32) -> (i32, i32, i32) {
    %c0_i32 = arith.constant 0 : i32
    %c0_i32_0 = arith.constant 0 : i32
    %c0_i32_1 = arith.constant 0 : i32
    %c0_i32_2 = arith.constant 0 : i32
    return %c0_i32, %c0_i32_0, %c0_i32_1 : i32, i32, i32
  }
  func.func @transform_7(%arg0: i32) -> (i32, i32, i32) {
    %c0_i32 = arith.constant 0 : i32
    %c0_i32_0 = arith.constant 0 : i32
    %c0_i32_1 = arith.constant 0 : i32
    %c0_i32_2 = arith.constant 0 : i32
    return %c0_i32, %c0_i32_0, %c0_i32_1 : i32, i32, i32
  }
  func.func @transform_8(%arg0: i32) -> (i32, i32) {
    %c0_i32 = arith.constant 0 : i32
    %c0_i32_0 = arith.constant 0 : i32
    %c0_i32_1 = arith.constant 0 : i32
    return %c0_i32, %c0_i32_0 : i32, i32
  }
  func.func @transform_9(%arg0: i32) -> (i32, i32) {
    %c0_i32 = arith.constant 0 : i32
    %c0_i32_0 = arith.constant 0 : i32
    %c0_i32_1 = arith.constant 0 : i32
    return %c0_i32, %c0_i32_0 : i32, i32
  }
  func.func @transform_10(%arg0: i32) -> (i32, i32, i32) {
    %c0_i32 = arith.constant 0 : i32
    %c0_i32_0 = arith.constant 0 : i32
    %c0_i32_1 = arith.constant 0 : i32
    %c0_i32_2 = arith.constant 0 : i32
    return %c0_i32, %c0_i32_0, %c0_i32_1 : i32, i32, i32
  }
  func.func @transform_11(%arg0: i32) -> (i32, i32, i32) {
    %c0_i32 = arith.constant 0 : i32
    %c0_i32_0 = arith.constant 0 : i32
    %c0_i32_1 = arith.constant 0 : i32
    %c0_i32_2 = arith.constant 0 : i32
    return %c0_i32, %c0_i32_0, %c0_i32_1 : i32, i32, i32
  }
  func.func @transform_12(%arg0: i32) -> (i32, i32) {
    %c0_i32 = arith.constant 0 : i32
    %c0_i32_0 = arith.constant 0 : i32
    %c0_i32_1 = arith.constant 0 : i32
    return %c0_i32, %c0_i32_0 : i32, i32
  }
  func.func @transform_13(%arg0: i32) -> (i32, i32) {
    %c0_i32 = arith.constant 0 : i32
    %c0_i32_0 = arith.constant 0 : i32
    %c0_i32_1 = arith.constant 0 : i32
    return %c0_i32, %c0_i32_0 : i32, i32
  }
  func.func @transform_14(%arg0: i32) -> (i32, i32, i32) {
    %c0_i32 = arith.constant 0 : i32
    %c0_i32_0 = arith.constant 0 : i32
    %c0_i32_1 = arith.constant 0 : i32
    return %arg0, %c0_i32, %c0_i32_0 : i32, i32, i32
  }
}

</mosaic_0001>

<llo_original>
// kernel: pka_forward.1
$region0: #{pka_forward.1}
  #allocation0 [shape = 'u32[]', space=smem, size = 0x4, offset = 0x4, fixed_abs, tag = 'smem constant byte address 0x4 - core index']
  #allocation1 [shape = 'u32[144,128]{1,0:T(1,128)}', space=vmem, size = 0x12000, scoped, tag = 'internal scratch']
  #allocation2 [shape = 'f32[1,1]{1,0:T(1,128)S(1)}', space=vmem, size = 0x200, scoped, tag = 'scoped memory for pka_forward.1']
  %s0 = inlined_call_operand.vmem [shape: bf16[32,56], index: 0, kind: input, shape index: {}]
  %s1 = inlined_call_operand.vmem [shape: f32[16,16], index: 1, kind: input, shape index: {}]
  %s2 = inlined_call_operand.vmem [shape: bf16[56,32], index: 2, kind: input, shape index: {}]
  %s3 = inlined_call_operand.vmem [shape: bf16[2,32,64], index: 3, kind: input, shape index: {}]
  %s4 = inlined_call_operand.vmem [shape: f32[2,1,64], index: 4, kind: input, shape index: {}]
  %s5 = inlined_call_operand.vmem [shape: f32[2,1,32], index: 5, kind: input, shape index: {}]
  %s6 = inlined_call_operand.vmem [shape: f32[2,1,32], index: 6, kind: input, shape index: {}]
  %s7 = inlined_call_operand.vmem [shape: f32[2,1,1], index: 7, kind: input, shape index: {}]
  %s8 = inlined_call_operand.vmem [shape: bf16[32,32], index: 8, kind: input, shape index: {}]
  %s9 = inlined_call_operand.vmem [shape: f32[1,32], index: 9, kind: input, shape index: {}]
  %s10 = inlined_call_operand.vmem [shape: bf16[1,32,32], index: 10, kind: input, shape index: {}]
  %s11 = inlined_call_operand.vmem [shape: f32[1,1,32], index: 11, kind: input, shape index: {}]
  %s12 = inlined_call_operand.vmem [shape: bf16[1,32], index: 12, kind: input, shape index: {}]
  %s13 = inlined_call_operand.<no memory space> [shape: f32[1,1], index: 13, kind: input, shape index: {}]
  %s14 = inlined_call_operand.hbm [shape: f32[2,1,16], index: 14, kind: output, shape index: {}]
  %s15 = sld [smem:[#allocation0]]
  $region89: #{pka_forward.1} parent=0
    _
  %s17 = ssub.s32 1, %s15
  %s18 = scalar_select 0, %s17, %s15
  %v19 = vstv %s13
  %20 = vst [vmem:[#allocation2] sm:$0x1] %v19
  $region1: #{pka_forward.1} parent=0
    #allocation3 [shape = 'u8[1024]{0}', space=vmem, size = 0x400, scoped, tag = 'output window, operand 0']
    #allocation4 [shape = 's32[2]{0}', space=sflag, size = 0x8, scoped, tag = 'scoped memory for pka_forward.1']
    %21 = vsyncpa [#allocation4], 0
    %s22 = scalar_lea.sflag [#allocation4], 1
    %23 = vsyncpa %s22, 0
    loop: start=0, step=1, limit=4
    $region2: #{pka_forward.1} parent=1 // loop_pre_header
      _
    $region3: #{pka_forward.1} parent=1 // loop_header
      %s25 = sphi 0, %s29
      %p26 = scmp.ge.s32.totalorder %s25, 4
      %s35 = sphi 0, %s37
      %s38 = sphi 0, %s35
      %s39 = sphi 0, %s38
      %s55 = sphi 0, %s39
      %s59 = sphi 0, %s59
      %s61 = sphi 0, %s59
      %s62 = sphi 0, %s61
      %s76 = sphi 0, %s62
      %s80 = sphi 0, %s80
      %s82 = sphi 0, %s80
      %s83 = sphi 0, %s82
      %s97 = sphi 0, %s83
      %s101 = sphi 0, %s101
      %s103 = sphi 0, %s101
      %s104 = sphi 0, %s103
      %s118 = sphi 0, %s104
      %s122 = sphi 0, %s122
      %s124 = sphi 0, %s122
      %s125 = sphi 0, %s124
      %s139 = sphi 0, %s125
      %s143 = sphi 0, %s143
      %s145 = sphi 0, %s143
      %s146 = sphi 0, %s145
      %s160 = sphi 0, %s146
      %s164 = sphi 0, %s164
      %s166 = sphi 0, %s164
      %s167 = sphi 0, %s166
      %s181 = sphi 0, %s167
      %s185 = sphi 0, %s185
      %s187 = sphi 0, %s185
      %s188 = sphi 0, %s187
      %s202 = sphi 0, %s188
      %s206 = sphi 0, %s206
      %s208 = sphi 0, %s206
      %s209 = sphi 0, %s208
      %s223 = sphi 0, %s209
      %s227 = sphi 0, %s227
      %s229 = sphi 0, %s227
      %s230 = sphi 0, %s229
      %s244 = sphi 0, %s230
      %s248 = sphi 0, %s248
      %s250 = sphi 0, %s248
      %s251 = sphi 0, %s250
      %s265 = sphi 0, %s251
      %s269 = sphi 0, %s269
      %s271 = sphi 0, %s269
      %s272 = sphi 0, %s271
      %s286 = sphi 0, %s272
      %s290 = sphi 0, %s290
      %s292 = sphi 0, %s290
      %s293 = sphi 0, %s292
      %s307 = sphi 0, %s293
      %s311 = sphi 0, %s311
      %s313 = sphi 0, %s311
      %s314 = sphi 0, %s313
      %s328 = sphi 0, %s314
      %s334 = sphi 0, %s336
      %s337 = sphi 0, %s334
      %s338 = sphi 0, %s337
      %s354 = sphi 0, %s338
    $region4: #{pka_forward.1} parent=1 // loop_header_branch
      %28 = sbr.rel (%p26) target = $region8
    $region5: #{pka_forward.1} parent=1 // loop_body
      %s30 = ssub.s32 %s25, 1
      %s31 = ssub.s32 %s25, 2
      %s32 = sadd.s32 %s25, 1
      %s33 = ssub.s32 %s25, %s32
      %p34 = scmp.eq.s32.totalorder %s33, 0
      %s36 = sadd.s32 %s35, 1
      %s37 = scalar_select %p34, %s35, %s36
      %p40 = pneg %p34
      %p41 = scmp.eq.s32.totalorder %s25, 1
      %p42 = por %p40, %p41
      %p43 = scmp.ne.s32.totalorder %s35, %s38
      %p44 = scmp.eq.s32.totalorder %s25, 0
      %p45 = por %p43, %p44
      %p46 = scmp.ne.s32.totalorder %s35, %s38
      %p47 = scmp.eq.s32.totalorder %s30, 1
      %p48 = por %p46, %p47
      %p49 = scmp.ne.s32.totalorder %s38, %s39
      %p50 = scmp.eq.s32.totalorder %s30, 0
      %p51 = por %p49, %p50
      %p52 = scmp.ne.s32.totalorder %s38, %s39
      %p53 = scmp.eq.s32.totalorder %s31, 1
      %p54 = por %p52, %p53
      %p56 = scmp.ne.s32.totalorder %s39, %s55
      %p57 = scmp.eq.s32.totalorder %s31, 0
      %p58 = por %p56, %p57
      %s60 = sadd.s32 %s59, 1
      %p63 = scmp.eq.s32.totalorder %s25, 1
      %p64 = scmp.ne.s32.totalorder %s59, %s61
      %p65 = scmp.eq.s32.totalorder %s25, 0
      %p66 = por %p64, %p65
      %p67 = scmp.ne.s32.totalorder %s59, %s61
      %p68 = scmp.eq.s32.totalorder %s30, 1
      %p69 = por %p67, %p68
      %p70 = scmp.ne.s32.totalorder %s61, %s62
      %p71 = scmp.eq.s32.totalorder %s30, 0
      %p72 = por %p70, %p71
      %p73 = scmp.ne.s32.totalorder %s61, %s62
      %p74 = scmp.eq.s32.totalorder %s31, 1
      %p75 = por %p73, %p74
      %p77 = scmp.ne.s32.totalorder %s62, %s76
      %p78 = scmp.eq.s32.totalorder %s31, 0
      %p79 = por %p77, %p78
      %s81 = sadd.s32 %s80, 1
      %p84 = scmp.eq.s32.totalorder %s25, 1
      %p85 = scmp.ne.s32.totalorder %s80, %s82
      %p86 = scmp.eq.s32.totalorder %s25, 0
      %p87 = por %p85, %p86
      %p88 = scmp.ne.s32.totalorder %s80, %s82
      %p89 = scmp.eq.s32.totalorder %s30, 1
      %p90 = por %p88, %p89
      %p91 = scmp.ne.s32.totalorder %s82, %s83
      %p92 = scmp.eq.s32.totalorder %s30, 0
      %p93 = por %p91, %p92
      %p94 = scmp.ne.s32.totalorder %s82, %s83
      %p95 = scmp.eq.s32.totalorder %s31, 1
      %p96 = por %p94, %p95
      %p98 = scmp.ne.s32.totalorder %s83, %s97
      %p99 = scmp.eq.s32.totalorder %s31, 0
      %p100 = por %p98, %p99
      %s102 = sadd.s32 %s101, 1
      %p105 = scmp.eq.s32.totalorder %s25, 1
      %p106 = scmp.ne.s32.totalorder %s101, %s103
      %p107 = scmp.eq.s32.totalorder %s25, 0
      %p108 = por %p106, %p107
      %p109 = scmp.ne.s32.totalorder %s101, %s103
      %p110 = scmp.eq.s32.totalorder %s30, 1
      %p111 = por %p109, %p110
      %p112 = scmp.ne.s32.totalorder %s103, %s104
      %p113 = scmp.eq.s32.totalorder %s30, 0
      %p114 = por %p112, %p113
      %p115 = scmp.ne.s32.totalorder %s103, %s104
      %p116 = scmp.eq.s32.totalorder %s31, 1
      %p117 = por %p115, %p116
      %p119 = scmp.ne.s32.totalorder %s104, %s118
      %p120 = scmp.eq.s32.totalorder %s31, 0
      %p121 = por %p119, %p120
      %s123 = sadd.s32 %s122, 1
      %p126 = scmp.eq.s32.totalorder %s25, 1
      %p127 = scmp.ne.s32.totalorder %s122, %s124
      %p128 = scmp.eq.s32.totalorder %s25, 0
      %p129 = por %p127, %p128
      %p130 = scmp.ne.s32.totalorder %s122, %s124
      %p131 = scmp.eq.s32.totalorder %s30, 1
      %p132 = por %p130, %p131
      %p133 = scmp.ne.s32.totalorder %s124, %s125
      %p134 = scmp.eq.s32.totalorder %s30, 0
      %p135 = por %p133, %p134
      %p136 = scmp.ne.s32.totalorder %s124, %s125
      %p137 = scmp.eq.s32.totalorder %s31, 1
      %p138 = por %p136, %p137
      %p140 = scmp.ne.s32.totalorder %s125, %s139
      %p141 = scmp.eq.s32.totalorder %s31, 0
      %p142 = por %p140, %p141
      %s144 = sadd.s32 %s143, 1
      %p147 = scmp.eq.s32.totalorder %s25, 1
      %p148 = scmp.ne.s32.totalorder %s143, %s145
      %p149 = scmp.eq.s32.totalorder %s25, 0
      %p150 = por %p148, %p149
      %p151 = scmp.ne.s32.totalorder %s143, %s145
      %p152 = scmp.eq.s32.totalorder %s30, 1
      %p153 = por %p151, %p152
      %p154 = scmp.ne.s32.totalorder %s145, %s146
      %p155 = scmp.eq.s32.totalorder %s30, 0
      %p156 = por %p154, %p155
      %p157 = scmp.ne.s32.totalorder %s145, %s146
      %p158 = scmp.eq.s32.totalorder %s31, 1
      %p159 = por %p157, %p158
      %p161 = scmp.ne.s32.totalorder %s146, %s160
      %p162 = scmp.eq.s32.totalorder %s31, 0
      %p163 = por %p161, %p162
      %s165 = sadd.s32 %s164, 1
      %p168 = scmp.eq.s32.totalorder %s25, 1
      %p169 = scmp.ne.s32.totalorder %s164, %s166
      %p170 = scmp.eq.s32.totalorder %s25, 0
      %p171 = por %p169, %p170
      %p172 = scmp.ne.s32.totalorder %s164, %s166
      %p173 = scmp.eq.s32.totalorder %s30, 1
      %p174 = por %p172, %p173
      %p175 = scmp.ne.s32.totalorder %s166, %s167
      %p176 = scmp.eq.s32.totalorder %s30, 0
      %p177 = por %p175, %p176
      %p178 = scmp.ne.s32.totalorder %s166, %s167
      %p179 = scmp.eq.s32.totalorder %s31, 1
      %p180 = por %p178, %p179
      %p182 = scmp.ne.s32.totalorder %s167, %s181
      %p183 = scmp.eq.s32.totalorder %s31, 0
      %p184 = por %p182, %p183
      %s186 = sadd.s32 %s185, 1
      %p189 = scmp.eq.s32.totalorder %s25, 1
      %p190 = scmp.ne.s32.totalorder %s185, %s187
      %p191 = scmp.eq.s32.totalorder %s25, 0
      %p192 = por %p190, %p191
      %p193 = scmp.ne.s32.totalorder %s185, %s187
      %p194 = scmp.eq.s32.totalorder %s30, 1
      %p195 = por %p193, %p194
      %p196 = scmp.ne.s32.totalorder %s187, %s188
      %p197 = scmp.eq.s32.totalorder %s30, 0
      %p198 = por %p196, %p197
      %p199 = scmp.ne.s32.totalorder %s187, %s188
      %p200 = scmp.eq.s32.totalorder %s31, 1
      %p201 = por %p199, %p200
      %p203 = scmp.ne.s32.totalorder %s188, %s202
      %p204 = scmp.eq.s32.totalorder %s31, 0
      %p205 = por %p203, %p204
      %s207 = sadd.s32 %s206, 1
      %p210 = scmp.eq.s32.totalorder %s25, 1
      %p211 = scmp.ne.s32.totalorder %s206, %s208
      %p212 = scmp.eq.s32.totalorder %s25, 0
      %p213 = por %p211, %p212
      %p214 = scmp.ne.s32.totalorder %s206, %s208
      %p215 = scmp.eq.s32.totalorder %s30, 1
      %p216 = por %p214, %p215
      %p217 = scmp.ne.s32.totalorder %s208, %s209
      %p218 = scmp.eq.s32.totalorder %s30, 0
      %p219 = por %p217, %p218
      %p220 = scmp.ne.s32.totalorder %s208, %s209
      %p221 = scmp.eq.s32.totalorder %s31, 1
      %p222 = por %p220, %p221
      %p224 = scmp.ne.s32.totalorder %s209, %s223
      %p225 = scmp.eq.s32.totalorder %s31, 0
      %p226 = por %p224, %p225
      %s228 = sadd.s32 %s227, 1
      %p231 = scmp.eq.s32.totalorder %s25, 1
      %p232 = scmp.ne.s32.totalorder %s227, %s229
      %p233 = scmp.eq.s32.totalorder %s25, 0
      %p234 = por %p232, %p233
      %p235 = scmp.ne.s32.totalorder %s227, %s229
      %p236 = scmp.eq.s32.totalorder %s30, 1
      %p237 = por %p235, %p236
      %p238 = scmp.ne.s32.totalorder %s229, %s230
      %p239 = scmp.eq.s32.totalorder %s30, 0
      %p240 = por %p238, %p239
      %p241 = scmp.ne.s32.totalorder %s229, %s230
      %p242 = scmp.eq.s32.totalorder %s31, 1
      %p243 = por %p241, %p242
      %p245 = scmp.ne.s32.totalorder %s230, %s244
      %p246 = scmp.eq.s32.totalorder %s31, 0
      %p247 = por %p245, %p246
      %s249 = sadd.s32 %s248, 1
      %p252 = scmp.eq.s32.totalorder %s25, 1
      %p253 = scmp.ne.s32.totalorder %s248, %s250
      %p254 = scmp.eq.s32.totalorder %s25, 0
      %p255 = por %p253, %p254
      %p256 = scmp.ne.s32.totalorder %s248, %s250
      %p257 = scmp.eq.s32.totalorder %s30, 1
      %p258 = por %p256, %p257
      %p259 = scmp.ne.s32.totalorder %s250, %s251
      %p260 = scmp.eq.s32.totalorder %s30, 0
      %p261 = por %p259, %p260
      %p262 = scmp.ne.s32.totalorder %s250, %s251
      %p263 = scmp.eq.s32.totalorder %s31, 1
      %p264 = por %p262, %p263
      %p266 = scmp.ne.s32.totalorder %s251, %s265
      %p267 = scmp.eq.s32.totalorder %s31, 0
      %p268 = por %p266, %p267
      %s270 = sadd.s32 %s269, 1
      %p273 = scmp.eq.s32.totalorder %s25, 1
      %p274 = scmp.ne.s32.totalorder %s269, %s271
      %p275 = scmp.eq.s32.totalorder %s25, 0
      %p276 = por %p274, %p275
      %p277 = scmp.ne.s32.totalorder %s269, %s271
      %p278 = scmp.eq.s32.totalorder %s30, 1
      %p279 = por %p277, %p278
      %p280 = scmp.ne.s32.totalorder %s271, %s272
      %p281 = scmp.eq.s32.totalorder %s30, 0
      %p282 = por %p280, %p281
      %p283 = scmp.ne.s32.totalorder %s271, %s272
      %p284 = scmp.eq.s32.totalorder %s31, 1
      %p285 = por %p283, %p284
      %p287 = scmp.ne.s32.totalorder %s272, %s286
      %p288 = scmp.eq.s32.totalorder %s31, 0
      %p289 = por %p287, %p288
      %s291 = sadd.s32 %s290, 1
      %p294 = scmp.eq.s32.totalorder %s25, 1
      %p295 = scmp.ne.s32.totalorder %s290, %s292
      %p296 = scmp.eq.s32.totalorder %s25, 0
      %p297 = por %p295, %p296
      %p298 = scmp.ne.s32.totalorder %s290, %s292
      %p299 = scmp.eq.s32.totalorder %s30, 1
      %p300 = por %p298, %p299
      %p301 = scmp.ne.s32.totalorder %s292, %s293
      %p302 = scmp.eq.s32.totalorder %s30, 0
      %p303 = por %p301, %p302
      %p304 = scmp.ne.s32.totalorder %s292, %s293
      %p305 = scmp.eq.s32.totalorder %s31, 1
      %p306 = por %p304, %p305
      %p308 = scmp.ne.s32.totalorder %s293, %s307
      %p309 = scmp.eq.s32.totalorder %s31, 0
      %p310 = por %p308, %p309
      %s312 = sadd.s32 %s311, 1
      %p315 = scmp.eq.s32.totalorder %s25, 1
      %p316 = scmp.ne.s32.totalorder %s311, %s313
      %p317 = scmp.eq.s32.totalorder %s25, 0
      %p318 = por %p316, %p317
      %p319 = scmp.ne.s32.totalorder %s311, %s313
      %p320 = scmp.eq.s32.totalorder %s30, 1
      %p321 = por %p319, %p320
      %p322 = scmp.ne.s32.totalorder %s313, %s314
      %p323 = scmp.eq.s32.totalorder %s30, 0
      %p324 = por %p322, %p323
      %p325 = scmp.ne.s32.totalorder %s313, %s314
      %p326 = scmp.eq.s32.totalorder %s31, 1
      %p327 = por %p325, %p326
      %p329 = scmp.ne.s32.totalorder %s314, %s328
      %p330 = scmp.eq.s32.totalorder %s31, 0
      %p331 = por %p329, %p330
      %s332 = ssub.s32 %s25, %s32
      %p333 = scmp.eq.s32.totalorder %s332, 0
      %s335 = sadd.s32 %s334, 1
      %s336 = scalar_select %p333, %s334, %s335
      %p339 = pneg %p333
      %p340 = scmp.eq.s32.totalorder %s25, 1
      %p341 = por %p339, %p340
      %p342 = scmp.ne.s32.totalorder %s334, %s337
      %p343 = scmp.eq.s32.totalorder %s25, 0
      %p344 = por %p342, %p343
      %p345 = scmp.ne.s32.totalorder %s334, %s337
      %p346 = scmp.eq.s32.totalorder %s30, 1
      %p347 = por %p345, %p346
      %p348 = scmp.ne.s32.totalorder %s337, %s338
      %p349 = scmp.eq.s32.totalorder %s30, 0
      %p350 = por %p348, %p349
      %p351 = scmp.ne.s32.totalorder %s337, %s338
      %p352 = scmp.eq.s32.totalorder %s31, 1
      %p353 = por %p351, %p352
      %p355 = scmp.ne.s32.totalorder %s338, %s354
      %p356 = scmp.eq.s32.totalorder %s31, 0
      %p357 = por %p355, %p356
      %p358 = scmp.le.s32.totalorder 1, %s25
      %p359 = scmp.lt.s32.totalorder %s25, 3
      %p360 = pnand %p358, %p359
      %p361 = pneg %p360
      // Predicated region
      $region9: #{pka_forward.1} parent=5 // pred_check
        _
      $region10: #{pka_forward.1} parent=5 // pred_check_branch
        %363 = sbr.rel (%p360) target = $region12
      $region11: #{pka_forward.1} parent=5 // pred_region
        %s364 = ssub.s32 %s25, 1
        // Predicated region
        $region13: #{pka_forward.1} parent=11 // pred_check
          %p365 = pneg %p72
        $region14: #{pka_forward.1} parent=11 // pred_check_branch
          %367 = sbr.rel (%p365) target = $region16
        $region15: #{pka_forward.1} parent=11 // pred_region
          _
        $region16: #{pka_forward.1} parent=11 // pred_fallthru
          _
        // Predicated region
        $region17: #{pka_forward.1} parent=11 // pred_check
          %p368 = pneg %p93
        $region18: #{pka_forward.1} parent=11 // pred_check_branch
          %370 = sbr.rel (%p368) target = $region20
        $region19: #{pka_forward.1} parent=11 // pred_region
          _
        $region20: #{pka_forward.1} parent=11 // pred_fallthru
          _
        // Predicated region
        $region21: #{pka_forward.1} parent=11 // pred_check
          %p371 = pneg %p114
        $region22: #{pka_forward.1} parent=11 // pred_check_branch
          %373 = sbr.rel (%p371) target = $region24
        $region23: #{pka_forward.1} parent=11 // pred_region
          _
        $region24: #{pka_forward.1} parent=11 // pred_fallthru
          _
        // Predicated region
        $region25: #{pka_forward.1} parent=11 // pred_check
          %p374 = pneg %p135
        $region26: #{pka_forward.1} parent=11 // pred_check_branch
          %376 = sbr.rel (%p374) target = $region28
        $region27: #{pka_forward.1} parent=11 // pred_region
          _
        $region28: #{pka_forward.1} parent=11 // pred_fallthru
          _
        // Predicated region
        $region29: #{pka_forward.1} parent=11 // pred_check
          %p377 = pneg %p156
        $region30: #{pka_forward.1} parent=11 // pred_check_branch
          %379 = sbr.rel (%p377) target = $region32
        $region31: #{pka_forward.1} parent=11 // pred_region
          _
        $region32: #{pka_forward.1} parent=11 // pred_fallthru
          _
        // Predicated region
        $region33: #{pka_forward.1} parent=11 // pred_check
          %p380 = pneg %p177
        $region34: #{pka_forward.1} parent=11 // pred_check_branch
          %382 = sbr.rel (%p380) target = $region36
        $region35: #{pka_forward.1} parent=11 // pred_region
          _
        $region36: #{pka_forward.1} parent=11 // pred_fallthru
          _
        // Predicated region
        $region37: #{pka_forward.1} parent=11 // pred_check
          %p383 = pneg %p198
        $region38: #{pka_forward.1} parent=11 // pred_check_branch
          %385 = sbr.rel (%p383) target = $region40
        $region39: #{pka_forward.1} parent=11 // pred_region
          _
        $region40: #{pka_forward.1} parent=11 // pred_fallthru
          _
        // Predicated region
        $region41: #{pka_forward.1} parent=11 // pred_check
          %p386 = pneg %p219
        $region42: #{pka_forward.1} parent=11 // pred_check_branch
          %388 = sbr.rel (%p386) target = $region44
        $region43: #{pka_forward.1} parent=11 // pred_region
          _
        $region44: #{pka_forward.1} parent=11 // pred_fallthru
          _
        // Predicated region
        $region45: #{pka_forward.1} parent=11 // pred_check
          %p389 = pneg %p240
        $region46: #{pka_forward.1} parent=11 // pred_check_branch
          %391 = sbr.rel (%p389) target = $region48
        $region47: #{pka_forward.1} parent=11 // pred_region
          _
        $region48: #{pka_forward.1} parent=11 // pred_fallthru
          _
        // Predicated region
        $region49: #{pka_forward.1} parent=11 // pred_check
          %p392 = pneg %p261
        $region50: #{pka_forward.1} parent=11 // pred_check_branch
          %394 = sbr.rel (%p392) target = $region52
        $region51: #{pka_forward.1} parent=11 // pred_region
          _
        $region52: #{pka_forward.1} parent=11 // pred_fallthru
          _
        // Predicated region
        $region53: #{pka_forward.1} parent=11 // pred_check
          %p395 = pneg %p282
        $region54: #{pka_forward.1} parent=11 // pred_check_branch
          %397 = sbr.rel (%p395) target = $region56
        $region55: #{pka_forward.1} parent=11 // pred_region
          _
        $region56: #{pka_forward.1} parent=11 // pred_fallthru
          _
        // Predicated region
        $region57: #{pka_forward.1} parent=11 // pred_check
          %p398 = pneg %p303
        $region58: #{pka_forward.1} parent=11 // pred_check_branch
          %400 = sbr.rel (%p398) target = $region60
        $region59: #{pka_forward.1} parent=11 // pred_region
          _
        $region60: #{pka_forward.1} parent=11 // pred_fallthru
          _
        // Predicated region
        $region61: #{pka_forward.1} parent=11 // pred_check
          %p401 = pneg %p324
        $region62: #{pka_forward.1} parent=11 // pred_check_branch
          %403 = sbr.rel (%p401) target = $region64
        $region63: #{pka_forward.1} parent=11 // pred_region
          _
        $region64: #{pka_forward.1} parent=11 // pred_fallthru
          _
      $region12: #{pka_forward.1} parent=5 // pred_fallthru
        _
      %p404 = scmp.lt.s32.totalorder %s25, 2
      // Predicated region
      $region65: #{pka_forward.1} parent=5 // pred_check
        %p405 = pneg %p404
      $region66: #{pka_forward.1} parent=5 // pred_check_branch
        %407 = sbr.rel (%p405) target = $region68
      $region67: #{pka_forward.1} parent=5 // pred_region
        // Predicated region
        $region69: #{pka_forward.1} parent=67 // pred_check
          %p408 = pneg %p45
        $region70: #{pka_forward.1} parent=67 // pred_check_branch
          %410 = sbr.rel (%p408) target = $region72
        $region71: #{pka_forward.1} parent=67 // pred_region
          %s411 = smul.u32 2, %s25
          %p412 = scmp.lt.s32.totalorder %s411, 3
          %s413 = scalar_select %p412, %s411, 3
          %s414 = smul.addr %s413, 4
          %s415 = scalar_lea.vmem %s0, %s414
          %s416 = smul.u32 2, %s25
        $region72: #{pka_forward.1} parent=67 // pred_fallthru
          _
      $region68: #{pka_forward.1} parent=5 // pred_fallthru
        _
      %p417 = scmp.le.s32.totalorder 1, %s25
      %p418 = scmp.lt.s32.totalorder %s25, 3
      %p419 = pnand %p417, %p418
      %p420 = pneg %p419
      // Predicated region
      $region73: #{pka_forward.1} parent=5 // pred_check
        _
      $region74: #{pka_forward.1} parent=5 // pred_check_branch
        %422 = sbr.rel (%p419) target = $region76
      $region75: #{pka_forward.1} parent=5 // pred_region
        %s423 = ssub.s32 %s25, 1
        %s424 = smul.u32 2, %s30
        %p425 = scmp.lt.s32.totalorder %s424, 3
        %s426 = scalar_select %p425, %s424, 3
        %s427 = smul.addr %s426, 4
        %s428 = scalar_lea.vmem %s0, %s427
        %p429 = pneg %p51
        %p430 = pneg %p48
        %p431 = pneg %p72
        %p432 = pneg %p69
        %p433 = pneg %p93
        %p434 = pneg %p90
        %p435 = pneg %p114
        %p436 = pneg %p111
        %p437 = pneg %p135
        %p438 = pneg %p132
        %p439 = pneg %p156
        %p440 = pneg %p153
        %p441 = pneg %p177
        %p442 = pneg %p174
        %p443 = pneg %p198
        %p444 = pneg %p195
        %p445 = pneg %p219
        %p446 = pneg %p216
        %p447 = pneg %p240
        %p448 = pneg %p237
        %p449 = pneg %p261
        %p450 = pneg %p258
        %p451 = pneg %p282
        %p452 = pneg %p279
        %p453 = pneg %p303
        %p454 = pneg %p300
        %p455 = pneg %p324
        %p456 = pneg %p321
        %p457 = pneg %p350
        %p458 = pneg %p347
        %s459 = sand.u32 %s337, 1
        %s460 = scalar_lea.sflag [#allocation4], %s459
        %s461 = sand.u32 %s337, 1
        %s462 = scalar_lea.vmem [#allocation3], %s461
        %s463 = smul.u32 2, %s30
        %p464 = scmp.lt.s32.totalorder %s463, 3
        %s465 = scalar_select %p464, %s463, 3
        %s466 = smul.addr %s465, 4
        %s467 = scalar_lea.vmem %s0, %s466
        %s468 = smul.u32 2, %s30
        %v470 = vld [vmem:[%s467] sm:$0xf]
        %v471 = vld [vmem:[%s467 + $0x4] sm:$0xf]
        %v472 = vld [vmem:[%s2] sm:$0xf]
        %v473 = vld [vmem:[%s2 + $0x4] sm:$0xf]
        %v474 = vld [vmem:[%s2 + $0x8] sm:$0xf]
        %v475 = vld [vmem:[%s2 + $0xc] sm:$0xf]
        %v476 = vld [vmem:[%s2 + $0x10] sm:$0xf]
        %v477 = vld [vmem:[%s2 + $0x14] sm:$0xf]
        %v478 = vld [vmem:[%s2 + $0x18] sm:$0xf]
        %v481 = vunpack.c.l.b16 %v470
        %v482 = vunpack.c.l.b16 %v471
        %v483 = vpack.c.b16 %v482, %v481
        %v491 = vunpack.c.l.b16 %v472
        %v492 = vunpack.c.l.b16 %v473
        %v493 = vunpack.c.l.b16 %v474
        %v494 = vunpack.c.l.b16 %v475
        %v495 = vunpack.c.l.b16 %v476
        %v496 = vunpack.c.l.b16 %v477
        %v497 = vunpack.c.l.b16 %v478
        %v498 = vpack.c.b16 %v492, %v491
        %v499 = vpack.c.b16 %v494, %v493
        %v500 = vpack.c.b16 %v496, %v495
        %v501 = vpack.c.b16 %v497, %v497
        %vm505 = vcmask 457728
        %v507 = vsel %vm505, %v483, 0
        %vm509 = vcmask 1043456
        %v511 = vsel %vm509, %v501, 0
        %513 = vmatprep.subr.bf16.mxu0 0
        %514 = vmatpush1.bf16.msra.mxu0 0
        %515 = vmatprep.subr.bf16.mxu0 0
        %516 = vmatpush1.bf16.msra.mxu0 0
        %517 = vmatprep.subr.bf16.mxu0 0
        %518 = vmatpush1.bf16.msra.mxu0 0
        %519 = vmatprep.subr.bf16.mxu0 0
        %520 = vmatpush1.bf16.msra.mxu0 0
        %521 = vmatprep.subr.bf16.mxu0 0
        %522 = vmatpush1.bf16.msra.mxu0 %v511
        %523 = vmatprep.subr.bf16.mxu0 0
        %524 = vmatpush1.bf16.msra.mxu0 %v500
        %525 = vmatprep.subr.bf16.mxu0 0
        %526 = vmatpush1.bf16.msra.mxu0 %v499
        %527 = vmatprep.subr.bf16.mxu0 0
        %528 = vmatpush1.bf16.msra.mxu0 %v498
        %529 = vmatprep.subr.bf16.mxu0 0
        %530 = vmatpush2.bf16.msra.mxu0 0
        %531 = vmatprep.subr.bf16.mxu0 0
        %532 = vmatpush2.bf16.msra.mxu0 0
        %533 = vmatprep.subr.bf16.mxu0 0
        %534 = vmatpush2.bf16.msra.mxu0 0
        %535 = vmatprep.subr.bf16.mxu0 0
        %536 = vmatpush2.bf16.msra.mxu0 0
        %537 = vmatprep.subr.bf16.mxu0 0
        %538 = vmatpush2.bf16.msra.mxu0 0
        %539 = vmatprep.subr.bf16.mxu0 0
        %540 = vmatpush2.bf16.msra.mxu0 0
        %541 = vmatprep.subr.bf16.mxu0 0
        %542 = vmatpush2.bf16.msra.mxu0 0
        %543 = vmatprep.subr.bf16.mxu0 0
        %544 = vmatpush2.bf16.msra.mxu0 0
        %545 = vmatprep.mubr.bf16.mxu0 0
        %546 = vmatmul.mubr.bf16.gmra.mxu0 %v507
        %v547 = vpop.f32.mrf.mxu0
        %v548 = vadd.f32 0.0, %v547
        %v549 = vpop.f32.mrf.mxu0
        %v550 = vpop.f32.mrf.mxu0
        %v551 = vadd.f32 0.0, %v550
        %v552 = vpop.f32.mrf.mxu0
        %553 = vdwg.mxu0
        %v554 = vld [vmem:[%s1] sm:$0xff]
        %v555 = vld [vmem:[%s1 + $0x8] sm:$0xff]
        %v556 = vpack.c.bf16 %v551, %v548
        %v557 = vld [vmem:[%s3] sm:$0xf]
        %v558 = vld [vmem:[%s3 + $0x4] sm:$0xf]
        %v559 = vld [vmem:[%s3 + $0x8] sm:$0xf]
        %v560 = vld [vmem:[%s3 + $0xc] sm:$0xf]
        %v561 = vld [vmem:[%s4] sm:$0x1]
        %v563 = vlaneseq
        %v564 = vshrl.u32 %v563, 7
        %v565 = vsub.s32 0, %v564
        %v566 = vrot.slane %v561, %v565
        %v572 = vunpack.c.l.b16 %v557
        %v573 = vunpack.c.l.b16 %v558
        %v574 = vunpack.c.l.b16 %v559
        %v575 = vunpack.c.l.b16 %v560
        %v576 = vpack.c.b16 %v573, %v572
        %v577 = vpack.c.b16 %v575, %v574
        %vm580 = vcmask 261120
        %v582 = vsel %vm580, %v556, 0
        %584 = vmatprep.subr.bf16.mxu0 0
        %585 = vmatpush1.bf16.msra.mxu0 0
        %586 = vmatprep.subr.bf16.mxu0 0
        %587 = vmatpush1.bf16.msra.mxu0 0
        %588 = vmatprep.subr.bf16.mxu0 0
        %589 = vmatpush1.bf16.msra.mxu0 0
        %590 = vmatprep.subr.bf16.mxu0 0
        %591 = vmatpush1.bf16.msra.mxu0 0
        %592 = vmatprep.subr.bf16.mxu0 0
        %593 = vmatpush1.bf16.msra.mxu0 0
        %594 = vmatprep.subr.bf16.mxu0 0
        %595 = vmatpush1.bf16.msra.mxu0 0
        %596 = vmatprep.subr.bf16.mxu0 0
        %597 = vmatpush1.bf16.msra.mxu0 %v577
        %598 = vmatprep.subr.bf16.mxu0 0
        %599 = vmatpush1.bf16.msra.mxu0 %v576
        %600 = vmatprep.subr.bf16.mxu0 0
        %601 = vmatpush2.bf16.msra.mxu0 0
        %602 = vmatprep.subr.bf16.mxu0 0
        %603 = vmatpush2.bf16.msra.mxu0 0
        %604 = vmatprep.subr.bf16.mxu0 0
        %605 = vmatpush2.bf16.msra.mxu0 0
        %606 = vmatprep.subr.bf16.mxu0 0
        %607 = vmatpush2.bf16.msra.mxu0 0
        %608 = vmatprep.subr.bf16.mxu0 0
        %609 = vmatpush2.bf16.msra.mxu0 0
        %610 = vmatprep.subr.bf16.mxu0 0
        %611 = vmatpush2.bf16.msra.mxu0 0
        %612 = vmatprep.subr.bf16.mxu0 0
        %613 = vmatpush2.bf16.msra.mxu0 0
        %614 = vmatprep.subr.bf16.mxu0 0
        %615 = vmatpush2.bf16.msra.mxu0 0
        %616 = vmatprep.mubr.bf16.mxu0 0
        %617 = vmatmul.mubr.bf16.gmra.mxu0 %v582
        %v618 = vpop.f32.mrf.mxu0
        %v619 = vadd.f32 %v566, %v618
        %v620 = vpop.f32.mrf.mxu0
        %v621 = vpop.f32.mrf.mxu0
        %v622 = vadd.f32 %v566, %v621
        %v623 = vpop.f32.mrf.mxu0
        %624 = vdwg.mxu0
        %v625 = vpack.c.bf16 %v622, %v619
        %627 = vrot.lane.b32.xlu0 %v625, 96
        %v628 = vpop.permute.xlu0 %627
        %v630 = vsel %vm580, %v628, 0
        %v633 = vsel %vm580, %v625, 0
        %635 = vmatprep.subr.bf16.mxu0 0
        %636 = vmatpush1.bf16.xpose.msra.mxu0 0
        %637 = vmatprep.subr.bf16.mxu0 0
        %638 = vmatpush1.bf16.xpose.msra.mxu0 0
        %639 = vmatprep.subr.bf16.mxu0 0
        %640 = vmatpush1.bf16.xpose.msra.mxu0 0
        %641 = vmatprep.subr.bf16.mxu0 0
        %642 = vmatpush1.bf16.xpose.msra.mxu0 0
        %643 = vmatprep.subr.bf16.mxu0 0
        %644 = vmatpush1.bf16.xpose.msra.mxu0 0
        %645 = vmatprep.subr.bf16.mxu0 0
        %646 = vmatpush1.bf16.xpose.msra.mxu0 0
        %647 = vmatprep.subr.bf16.mxu0 0
        %648 = vmatpush1.bf16.xpose.msra.mxu0 0
        %649 = vmatprep.subr.bf16.mxu0 0
        %650 = vmatpush1.bf16.xpose.msra.mxu0 %v633
        %651 = vmatprep.subr.bf16.mxu0 0
        %652 = vmatpush2.bf16.xpose.msra.mxu0 0
        %653 = vmatprep.subr.bf16.mxu0 0
        %654 = vmatpush2.bf16.xpose.msra.mxu0 0
        %655 = vmatprep.subr.bf16.mxu0 0
        %656 = vmatpush2.bf16.xpose.msra.mxu0 0
        %657 = vmatprep.subr.bf16.mxu0 0
        %658 = vmatpush2.bf16.xpose.msra.mxu0 0
        %659 = vmatprep.subr.bf16.mxu0 0
        %660 = vmatpush2.bf16.xpose.msra.mxu0 0
        %661 = vmatprep.subr.bf16.mxu0 0
        %662 = vmatpush2.bf16.xpose.msra.mxu0 0
        %663 = vmatprep.subr.bf16.mxu0 0
        %664 = vmatpush2.bf16.xpose.msra.mxu0 0
        %665 = vmatprep.subr.bf16.mxu0 0
        %666 = vmatpush2.bf16.xpose.msra.mxu0 0
        %667 = vmatprep.mubr.bf16.mxu0 0
        %668 = vmatmul.mubr.bf16.gmra.mxu0 %v630
        %v669 = vpop.f32.mrf.mxu0
        %v670 = vadd.f32 0.0, %v669
        %v671 = vpop.f32.mrf.mxu0
        %v672 = vpop.f32.mrf.mxu0
        %v673 = vadd.f32 0.0, %v672
        %v674 = vpop.f32.mrf.mxu0
        %675 = vdwg.mxu0
        %676 = vxpose.xlu0.b32.start [1/16] %v670, 128
        %677 = vxpose.xlu0.b32.cont [2/16] %v673, 128
        %678 = vxpose.xlu0.b32.cont [3/16] 0.0, 128
        %679 = vxpose.xlu0.b32.cont [4/16] 0.0, 128
        %680 = vxpose.xlu0.b32.cont [5/16] 0.0, 128
        %681 = vxpose.xlu0.b32.cont [6/16] 0.0, 128
        %682 = vxpose.xlu0.b32.cont [7/16] 0.0, 128
        %683 = vxpose.xlu0.b32.cont [8/16] 0.0, 128
        %684 = vxpose.xlu0.b32.cont [9/16] 0.0, 128
        %685 = vxpose.xlu0.b32.cont [10/16] 0.0, 128
        %686 = vxpose.xlu0.b32.cont [11/16] 0.0, 128
        %687 = vxpose.xlu0.b32.cont [12/16] 0.0, 128
        %688 = vxpose.xlu0.b32.cont [13/16] 0.0, 128
        %689 = vxpose.xlu0.b32.cont [14/16] 0.0, 128
        %690 = vxpose.xlu0.b32.cont [15/16] 0.0, 128
        %691 = vxpose.xlu0.b32.end [16/16] 0.0, 128
        %v692 = vpop.trf.xlu0
        %v693 = vpop.trf.xlu0
        %v694 = vpop.trf.xlu0
        %v695 = vpop.trf.xlu0
        %v696 = vpop.trf.xlu0
        %v697 = vpop.trf.xlu0
        %v698 = vpop.trf.xlu0
        %v699 = vpop.trf.xlu0
        %v700 = vpop.trf.xlu0
        %v701 = vpop.trf.xlu0
        %v702 = vpop.trf.xlu0
        %v703 = vpop.trf.xlu0
        %v704 = vpop.trf.xlu0
        %v705 = vpop.trf.xlu0
        %v706 = vpop.trf.xlu0
        %v707 = vpop.trf.xlu0
        %v708 = vadd.f32 %v670, %v692
        %v709 = vadd.f32 %v673, %v693
        %v710 = vadd.f32 %v708, %v554
        %v711 = vadd.f32 %v709, %v555
        %vm712 = vcmask 130048
        %v713 = vsel %vm712, %v710, -inf
        %714 = vmax.xlane.f32.xlu0 %v713
        %v715 = vpop.xlane.xlu0 %714
        %v716 = vsel %vm712, %v711, -inf
        %717 = vmax.xlane.f32.xlu0 %v716
        %v718 = vpop.xlane.xlu0 %717
        %v719 = vsub.f32 %v710, %v715
        %v720 = vsub.f32 %v711, %v718
        %v721 = vmul.f32 %v719, 1.442695
        %v722 = vpow.pop %v721
        %v723 = vmul.f32 %v720, 1.442695
        %v724 = vpow.pop %v723
        %v725 = vsel %vm712, %v722, 0.0
        %726 = vadd.xlane.f32.xlu0 %v725
        %v727 = vpop.xlane.xlu0 %726
        %v728 = vsel %vm712, %v724, 0.0
        %729 = vadd.xlane.f32.xlu0 %v728
        %v730 = vpop.xlane.xlu0 %729
        %v731 = vrcp.pop %v727
        %v732 = vrcp.pop %v730
        %v733 = vmul.f32 %v722, %v731
        %v734 = vmul.f32 %v724, %v732
        %v735 = vpack.c.bf16 %v734, %v733
        %736 = vxpose.xlu0.c.b16.start [1/8] %v735, 128
        %737 = vxpose.xlu0.c.b16.cont [2/8] 0, 128
        %738 = vxpose.xlu0.c.b16.cont [3/8] 0, 128
        %739 = vxpose.xlu0.c.b16.cont [4/8] 0, 128
        %740 = vxpose.xlu0.c.b16.cont [5/8] 0, 128
        %741 = vxpose.xlu0.c.b16.cont [6/8] 0, 128
        %742 = vxpose.xlu0.c.b16.cont [7/8] 0, 128
        %743 = vxpose.xlu0.c.b16.end [8/8] 0, 128
        %v744 = vpop.trf.xlu0
        %v745 = vpop.trf.xlu0
        %v746 = vpop.trf.xlu0
        %v747 = vpop.trf.xlu0
        %v748 = vpop.trf.xlu0
        %v749 = vpop.trf.xlu0
        %v750 = vpop.trf.xlu0
        %v751 = vpop.trf.xlu0
        %v753 = vsel %vm712, %v744, 0
        %755 = vmatprep.subr.bf16.mxu0 0
        %756 = vmatpush1.bf16.msra.mxu0 0
        %757 = vmatprep.subr.bf16.mxu0 0
        %758 = vmatpush1.bf16.msra.mxu0 0
        %759 = vmatprep.subr.bf16.mxu0 0
        %760 = vmatpush1.bf16.msra.mxu0 0
        %761 = vmatprep.subr.bf16.mxu0 0
        %762 = vmatpush1.bf16.msra.mxu0 0
        %763 = vmatprep.subr.bf16.mxu0 0
        %764 = vmatpush1.bf16.msra.mxu0 0
        %765 = vmatprep.subr.bf16.mxu0 0
        %766 = vmatpush1.bf16.msra.mxu0 0
        %767 = vmatprep.subr.bf16.mxu0 0
        %768 = vmatpush1.bf16.msra.mxu0 0
        %769 = vmatprep.subr.bf16.mxu0 0
        %770 = vmatpush1.bf16.msra.mxu0 %v625
        %771 = vmatprep.subr.bf16.mxu0 0
        %772 = vmatpush2.bf16.msra.mxu0 0
        %773 = vmatprep.subr.bf16.mxu0 0
        %774 = vmatpush2.bf16.msra.mxu0 0
        %775 = vmatprep.subr.bf16.mxu0 0
        %776 = vmatpush2.bf16.msra.mxu0 0
        %777 = vmatprep.subr.bf16.mxu0 0
        %778 = vmatpush2.bf16.msra.mxu0 0
        %779 = vmatprep.subr.bf16.mxu0 0
        %780 = vmatpush2.bf16.msra.mxu0 0
        %781 = vmatprep.subr.bf16.mxu0 0
        %782 = vmatpush2.bf16.msra.mxu0 0
        %783 = vmatprep.subr.bf16.mxu0 0
        %784 = vmatpush2.bf16.msra.mxu0 0
        %785 = vmatprep.subr.bf16.mxu0 0
        %786 = vmatpush2.bf16.msra.mxu0 0
        %787 = vmatprep.mubr.bf16.mxu0 0
        %788 = vmatmul.mubr.bf16.gmra.mxu0 %v753
        %v789 = vpop.f32.mrf.mxu0
        %v790 = vadd.f32 0.0, %v789
        %v791 = vpop.f32.mrf.mxu0
        %v792 = vpop.f32.mrf.mxu0
        %v793 = vadd.f32 0.0, %v792
        %v794 = vpop.f32.mrf.mxu0
        %795 = vdwg.mxu0
        %v796 = vmax.f32 %v790, 0.0
        %v797 = vmax.f32 %v793, 0.0
        %v798 = vld [vmem:[%s5] sm:$0x1]
        %v800 = vlaneseq
        %v801 = vshrl.u32 %v800, 7
        %v802 = vsub.s32 0, %v801
        %v803 = vrot.slane %v798, %v802
        %v805 = vmul.f32 %v548, %v803
        %v806 = vmul.f32 %v551, %v803
        %v807 = vld [vmem:[%s6] sm:$0x1]
        %v809 = vlaneseq
        %v810 = vshrl.u32 %v809, 7
        %v811 = vsub.s32 0, %v810
        %v812 = vrot.slane %v807, %v811
        %v814 = vmul.f32 %v796, %v812
        %v815 = vmul.f32 %v797, %v812
        %v816 = vadd.f32 %v805, %v814
        %v817 = vadd.f32 %v806, %v815
        %v818 = vsel %vm580, %v816, 0.0
        %819 = vadd.xlane.f32.xlu0 %v818
        %v820 = vpop.xlane.xlu0 %819
        %v821 = vsel %vm580, %v817, 0.0
        %822 = vadd.xlane.f32.xlu0 %v821
        %v823 = vpop.xlane.xlu0 %822
        %v824 = vld [vmem:[%s7] sm:$0x1]
        %v826 = vlaneseq
        %v827 = vshrl.u32 %v826, 7
        %v828 = vsub.s32 0, %v827
        %v829 = vrot.slane %v824, %v828
        %v831 = vadd.f32 %v820, %v829
        %v832 = vadd.f32 %v823, %v829
        %v833 = vxor.u32 %v831, 2147483648
        %v834 = vxor.u32 %v832, 2147483648
        %v835 = vmul.f32 %v833, 1.442695
        %v836 = vpow.pop %v835
        %v837 = vmul.f32 %v834, 1.442695
        %v838 = vpow.pop %v837
        %v839 = vadd.f32 %v836, 1.0
        %v840 = vadd.f32 %v838, 1.0
        %v841 = vrcp.pop %v839
        %v842 = vmul.f32 1.0, %v841
        %v843 = vrcp.pop %v840
        %v844 = vmul.f32 1.0, %v843
        %846 = vset.pattern.permute.xlu0 0
        %847 = vperm.xlu0 %846, %v842
        %v848 = vpop.permute.xlu0 %847
        %851 = vset.pattern.permute.xlu0 0
        %852 = vperm.xlu0 %851, %v844
        %v853 = vpop.permute.xlu0 %852
        %v855 = vmul.f32 %v848, %v548
        %v856 = vmul.f32 %v853, %v551
        %v857 = vsub.f32 1.0, %v842
        %v858 = vsub.f32 1.0, %v844
        %860 = vset.pattern.permute.xlu0 0
        %861 = vperm.xlu0 %860, %v857
        %v862 = vpop.permute.xlu0 %861
        %865 = vset.pattern.permute.xlu0 0
        %866 = vperm.xlu0 %865, %v858
        %v867 = vpop.permute.xlu0 %866
        %v869 = vmul.f32 %v862, %v796
        %v870 = vmul.f32 %v867, %v797
        %v871 = vadd.f32 %v855, %v869
        %v872 = vadd.f32 %v856, %v870
        %v873 = vpack.c.bf16 %v872, %v871
        %s874 = scalar_lea.vmem %s3, 16
        %v875 = vld [vmem:[%s874] sm:$0xf]
        %v876 = vld [vmem:[%s874 + $0x4] sm:$0xf]
        %v877 = vld [vmem:[%s874 + $0x8] sm:$0xf]
        %v878 = vld [vmem:[%s874 + $0xc] sm:$0xf]
        %s879 = scalar_lea.vmem %s4, 1
        %v880 = vld [vmem:[%s879] sm:$0x1]
        %v882 = vlaneseq
        %v883 = vshrl.u32 %v882, 7
        %v884 = vsub.s32 0, %v883
        %v885 = vrot.slane %v880, %v884
        %v891 = vunpack.c.l.b16 %v875
        %v892 = vunpack.c.l.b16 %v876
        %v893 = vunpack.c.l.b16 %v877
        %v894 = vunpack.c.l.b16 %v878
        %v895 = vpack.c.b16 %v892, %v891
        %v896 = vpack.c.b16 %v894, %v893
        %v900 = vsel %vm580, %v873, 0
        %902 = vmatprep.subr.bf16.mxu0 0
        %903 = vmatpush1.bf16.msra.mxu0 0
        %904 = vmatprep.subr.bf16.mxu0 0
        %905 = vmatpush1.bf16.msra.mxu0 0
        %906 = vmatprep.subr.bf16.mxu0 0
        %907 = vmatpush1.bf16.msra.mxu0 0
        %908 = vmatprep.subr.bf16.mxu0 0
        %909 = vmatpush1.bf16.msra.mxu0 0
        %910 = vmatprep.subr.bf16.mxu0 0
        %911 = vmatpush1.bf16.msra.mxu0 0
        %912 = vmatprep.subr.bf16.mxu0 0
        %913 = vmatpush1.bf16.msra.mxu0 0
        %914 = vmatprep.subr.bf16.mxu0 0
        %915 = vmatpush1.bf16.msra.mxu0 %v896
        %916 = vmatprep.subr.bf16.mxu0 0
        %917 = vmatpush1.bf16.msra.mxu0 %v895
        %918 = vmatprep.subr.bf16.mxu0 0
        %919 = vmatpush2.bf16.msra.mxu0 0
        %920 = vmatprep.subr.bf16.mxu0 0
        %921 = vmatpush2.bf16.msra.mxu0 0
        %922 = vmatprep.subr.bf16.mxu0 0
        %923 = vmatpush2.bf16.msra.mxu0 0
        %924 = vmatprep.subr.bf16.mxu0 0
        %925 = vmatpush2.bf16.msra.mxu0 0
        %926 = vmatprep.subr.bf16.mxu0 0
        %927 = vmatpush2.bf16.msra.mxu0 0
        %928 = vmatprep.subr.bf16.mxu0 0
        %929 = vmatpush2.bf16.msra.mxu0 0
        %930 = vmatprep.subr.bf16.mxu0 0
        %931 = vmatpush2.bf16.msra.mxu0 0
        %932 = vmatprep.subr.bf16.mxu0 0
        %933 = vmatpush2.bf16.msra.mxu0 0
        %934 = vmatprep.mubr.bf16.mxu0 0
        %935 = vmatmul.mubr.bf16.gmra.mxu0 %v900
        %v936 = vpop.f32.mrf.mxu0
        %v937 = vadd.f32 %v885, %v936
        %v938 = vpop.f32.mrf.mxu0
        %v939 = vpop.f32.mrf.mxu0
        %v940 = vadd.f32 %v885, %v939
        %v941 = vpop.f32.mrf.mxu0
        %942 = vdwg.mxu0
        %v943 = vpack.c.bf16 %v940, %v937
        %945 = vrot.lane.b32.xlu0 %v943, 96
        %v946 = vpop.permute.xlu0 %945
        %v948 = vsel %vm580, %v946, 0
        %v951 = vsel %vm580, %v943, 0
        %953 = vmatprep.subr.bf16.mxu0 0
        %954 = vmatpush1.bf16.xpose.msra.mxu0 0
        %955 = vmatprep.subr.bf16.mxu0 0
        %956 = vmatpush1.bf16.xpose.msra.mxu0 0
        %957 = vmatprep.subr.bf16.mxu0 0
        %958 = vmatpush1.bf16.xpose.msra.mxu0 0
        %959 = vmatprep.subr.bf16.mxu0 0
        %960 = vmatpush1.bf16.xpose.msra.mxu0 0
        %961 = vmatprep.subr.bf16.mxu0 0
        %962 = vmatpush1.bf16.xpose.msra.mxu0 0
        %963 = vmatprep.subr.bf16.mxu0 0
        %964 = vmatpush1.bf16.xpose.msra.mxu0 0
        %965 = vmatprep.subr.bf16.mxu0 0
        %966 = vmatpush1.bf16.xpose.msra.mxu0 0
        %967 = vmatprep.subr.bf16.mxu0 0
        %968 = vmatpush1.bf16.xpose.msra.mxu0 %v951
        %969 = vmatprep.subr.bf16.mxu0 0
        %970 = vmatpush2.bf16.xpose.msra.mxu0 0
        %971 = vmatprep.subr.bf16.mxu0 0
        %972 = vmatpush2.bf16.xpose.msra.mxu0 0
        %973 = vmatprep.subr.bf16.mxu0 0
        %974 = vmatpush2.bf16.xpose.msra.mxu0 0
        %975 = vmatprep.subr.bf16.mxu0 0
        %976 = vmatpush2.bf16.xpose.msra.mxu0 0
        %977 = vmatprep.subr.bf16.mxu0 0
        %978 = vmatpush2.bf16.xpose.msra.mxu0 0
        %979 = vmatprep.subr.bf16.mxu0 0
        %980 = vmatpush2.bf16.xpose.msra.mxu0 0
        %981 = vmatprep.subr.bf16.mxu0 0
        %982 = vmatpush2.bf16.xpose.msra.mxu0 0
        %983 = vmatprep.subr.bf16.mxu0 0
        %984 = vmatpush2.bf16.xpose.msra.mxu0 0
        %985 = vmatprep.mubr.bf16.mxu0 0
        %986 = vmatmul.mubr.bf16.gmra.mxu0 %v948
        %v987 = vpop.f32.mrf.mxu0
        %v988 = vadd.f32 0.0, %v987
        %v989 = vpop.f32.mrf.mxu0
        %v990 = vpop.f32.mrf.mxu0
        %v991 = vadd.f32 0.0, %v990
        %v992 = vpop.f32.mrf.mxu0
        %993 = vdwg.mxu0
        %994 = vxpose.xlu0.b32.start [1/16] %v988, 128
        %995 = vxpose.xlu0.b32.cont [2/16] %v991, 128
        %996 = vxpose.xlu0.b32.cont [3/16] 0.0, 128
        %997 = vxpose.xlu0.b32.cont [4/16] 0.0, 128
        %998 = vxpose.xlu0.b32.cont [5/16] 0.0, 128
        %999 = vxpose.xlu0.b32.cont [6/16] 0.0, 128
        %1000 = vxpose.xlu0.b32.cont [7/16] 0.0, 128
        %1001 = vxpose.xlu0.b32.cont [8/16] 0.0, 128
        %1002 = vxpose.xlu0.b32.cont [9/16] 0.0, 128
        %1003 = vxpose.xlu0.b32.cont [10/16] 0.0, 128
        %1004 = vxpose.xlu0.b32.cont [11/16] 0.0, 128
        %1005 = vxpose.xlu0.b32.cont [12/16] 0.0, 128
        %1006 = vxpose.xlu0.b32.cont [13/16] 0.0, 128
        %1007 = vxpose.xlu0.b32.cont [14/16] 0.0, 128
        %1008 = vxpose.xlu0.b32.cont [15/16] 0.0, 128
        %1009 = vxpose.xlu0.b32.end [16/16] 0.0, 128
        %v1010 = vpop.trf.xlu0
        %v1011 = vpop.trf.xlu0
        %v1012 = vpop.trf.xlu0
        %v1013 = vpop.trf.xlu0
        %v1014 = vpop.trf.xlu0
        %v1015 = vpop.trf.xlu0
        %v1016 = vpop.trf.xlu0
        %v1017 = vpop.trf.xlu0
        %v1018 = vpop.trf.xlu0
        %v1019 = vpop.trf.xlu0
        %v1020 = vpop.trf.xlu0
        %v1021 = vpop.trf.xlu0
        %v1022 = vpop.trf.xlu0
        %v1023 = vpop.trf.xlu0
        %v1024 = vpop.trf.xlu0
        %v1025 = vpop.trf.xlu0
        %v1026 = vadd.f32 %v988, %v1010
        %v1027 = vadd.f32 %v991, %v1011
        %v1028 = vadd.f32 %v1026, %v554
        %v1029 = vadd.f32 %v1027, %v555
        %v1030 = vsel %vm712, %v1028, -inf
        %1031 = vmax.xlane.f32.xlu0 %v1030
        %v1032 = vpop.xlane.xlu0 %1031
        %v1033 = vsel %vm712, %v1029, -inf
        %1034 = vmax.xlane.f32.xlu0 %v1033
        %v1035 = vpop.xlane.xlu0 %1034
        %v1036 = vsub.f32 %v1028, %v1032
        %v1037 = vsub.f32 %v1029, %v1035
        %v1038 = vmul.f32 %v1036, 1.442695
        %v1039 = vpow.pop %v1038
        %v1040 = vmul.f32 %v1037, 1.442695
        %v1041 = vpow.pop %v1040
        %v1042 = vsel %vm712, %v1039, 0.0
        %1043 = vadd.xlane.f32.xlu0 %v1042
        %v1044 = vpop.xlane.xlu0 %1043
        %v1045 = vsel %vm712, %v1041, 0.0
        %1046 = vadd.xlane.f32.xlu0 %v1045
        %v1047 = vpop.xlane.xlu0 %1046
        %v1048 = vrcp.pop %v1044
        %v1049 = vrcp.pop %v1047
        %v1050 = vmul.f32 %v1039, %v1048
        %v1051 = vmul.f32 %v1041, %v1049
        %v1052 = vpack.c.bf16 %v1051, %v1050
        %1053 = vxpose.xlu0.c.b16.start [1/8] %v1052, 128
        %1054 = vxpose.xlu0.c.b16.cont [2/8] 0, 128
        %1055 = vxpose.xlu0.c.b16.cont [3/8] 0, 128
        %1056 = vxpose.xlu0.c.b16.cont [4/8] 0, 128
        %1057 = vxpose.xlu0.c.b16.cont [5/8] 0, 128
        %1058 = vxpose.xlu0.c.b16.cont [6/8] 0, 128
        %1059 = vxpose.xlu0.c.b16.cont [7/8] 0, 128
        %1060 = vxpose.xlu0.c.b16.end [8/8] 0, 128
        %v1061 = vpop.trf.xlu0
        %v1062 = vpop.trf.xlu0
        %v1063 = vpop.trf.xlu0
        %v1064 = vpop.trf.xlu0
        %v1065 = vpop.trf.xlu0
        %v1066 = vpop.trf.xlu0
        %v1067 = vpop.trf.xlu0
        %v1068 = vpop.trf.xlu0
        %v1070 = vsel %vm712, %v1061, 0
        %1072 = vmatprep.subr.bf16.mxu0 0
        %1073 = vmatpush1.bf16.msra.mxu0 0
        %1074 = vmatprep.subr.bf16.mxu0 0
        %1075 = vmatpush1.bf16.msra.mxu0 0
        %1076 = vmatprep.subr.bf16.mxu0 0
        %1077 = vmatpush1.bf16.msra.mxu0 0
        %1078 = vmatprep.subr.bf16.mxu0 0
        %1079 = vmatpush1.bf16.msra.mxu0 0
        %1080 = vmatprep.subr.bf16.mxu0 0
        %1081 = vmatpush1.bf16.msra.mxu0 0
        %1082 = vmatprep.subr.bf16.mxu0 0
        %1083 = vmatpush1.bf16.msra.mxu0 0
        %1084 = vmatprep.subr.bf16.mxu0 0
        %1085 = vmatpush1.bf16.msra.mxu0 0
        %1086 = vmatprep.subr.bf16.mxu0 0
        %1087 = vmatpush1.bf16.msra.mxu0 %v943
        %1088 = vmatprep.subr.bf16.mxu0 0
        %1089 = vmatpush2.bf16.msra.mxu0 0
        %1090 = vmatprep.subr.bf16.mxu0 0
        %1091 = vmatpush2.bf16.msra.mxu0 0
        %1092 = vmatprep.subr.bf16.mxu0 0
        %1093 = vmatpush2.bf16.msra.mxu0 0
        %1094 = vmatprep.subr.bf16.mxu0 0
        %1095 = vmatpush2.bf16.msra.mxu0 0
        %1096 = vmatprep.subr.bf16.mxu0 0
        %1097 = vmatpush2.bf16.msra.mxu0 0
        %1098 = vmatprep.subr.bf16.mxu0 0
        %1099 = vmatpush2.bf16.msra.mxu0 0
        %1100 = vmatprep.subr.bf16.mxu0 0
        %1101 = vmatpush2.bf16.msra.mxu0 0
        %1102 = vmatprep.subr.bf16.mxu0 0
        %1103 = vmatpush2.bf16.msra.mxu0 0
        %1104 = vmatprep.mubr.bf16.mxu0 0
        %1105 = vmatmul.mubr.bf16.gmra.mxu0 %v1070
        %v1106 = vpop.f32.mrf.mxu0
        %v1107 = vadd.f32 0.0, %v1106
        %v1108 = vpop.f32.mrf.mxu0
        %v1109 = vpop.f32.mrf.mxu0
        %v1110 = vadd.f32 0.0, %v1109
        %v1111 = vpop.f32.mrf.mxu0
        %1112 = vdwg.mxu0
        %v1113 = vmax.f32 %v1107, 0.0
        %v1114 = vmax.f32 %v1110, 0.0
        %s1115 = scalar_lea.vmem %s5, 1
        %v1116 = vld [vmem:[%s1115] sm:$0x1]
        %v1118 = vlaneseq
        %v1119 = vshrl.u32 %v1118, 7
        %v1120 = vsub.s32 0, %v1119
        %v1121 = vrot.slane %v1116, %v1120
        %v1123 = vmul.f32 %v871, %v1121
        %v1124 = vmul.f32 %v872, %v1121
        %s1125 = scalar_lea.vmem %s6, 1
        %v1126 = vld [vmem:[%s1125] sm:$0x1]
        %v1128 = vlaneseq
        %v1129 = vshrl.u32 %v1128, 7
        %v1130 = vsub.s32 0, %v1129
        %v1131 = vrot.slane %v1126, %v1130
        %v1133 = vmul.f32 %v1113, %v1131
        %v1134 = vmul.f32 %v1114, %v1131
        %v1135 = vadd.f32 %v1123, %v1133
        %v1136 = vadd.f32 %v1124, %v1134
        %v1137 = vsel %vm580, %v1135, 0.0
        %1138 = vadd.xlane.f32.xlu0 %v1137
        %v1139 = vpop.xlane.xlu0 %1138
        %v1140 = vsel %vm580, %v1136, 0.0
        %1141 = vadd.xlane.f32.xlu0 %v1140
        %v1142 = vpop.xlane.xlu0 %1141
        %s1143 = scalar_lea.vmem %s7, 1
        %v1144 = vld [vmem:[%s1143] sm:$0x1]
        %v1146 = vlaneseq
        %v1147 = vshrl.u32 %v1146, 7
        %v1148 = vsub.s32 0, %v1147
        %v1149 = vrot.slane %v1144, %v1148
        %v1151 = vadd.f32 %v1139, %v1149
        %v1152 = vadd.f32 %v1142, %v1149
        %v1153 = vxor.u32 %v1151, 2147483648
        %v1154 = vxor.u32 %v1152, 2147483648
        %v1155 = vmul.f32 %v1153, 1.442695
        %v1156 = vpow.pop %v1155
        %v1157 = vmul.f32 %v1154, 1.442695
        %v1158 = vpow.pop %v1157
        %v1159 = vadd.f32 %v1156, 1.0
        %v1160 = vadd.f32 %v1158, 1.0
        %v1161 = vrcp.pop %v1159
        %v1162 = vmul.f32 1.0, %v1161
        %v1163 = vrcp.pop %v1160
        %v1164 = vmul.f32 1.0, %v1163
        %1166 = vset.pattern.permute.xlu0 0
        %1167 = vperm.xlu0 %1166, %v1162
        %v1168 = vpop.permute.xlu0 %1167
        %1171 = vset.pattern.permute.xlu0 0
        %1172 = vperm.xlu0 %1171, %v1164
        %v1173 = vpop.permute.xlu0 %1172
        %v1175 = vmul.f32 %v1168, %v871
        %v1176 = vmul.f32 %v1173, %v872
        %v1177 = vsub.f32 1.0, %v1162
        %v1178 = vsub.f32 1.0, %v1164
        %1180 = vset.pattern.permute.xlu0 0
        %1181 = vperm.xlu0 %1180, %v1177
        %v1182 = vpop.permute.xlu0 %1181
        %1185 = vset.pattern.permute.xlu0 0
        %1186 = vperm.xlu0 %1185, %v1178
        %v1187 = vpop.permute.xlu0 %1186
        %v1189 = vmul.f32 %v1182, %v1113
        %v1190 = vmul.f32 %v1187, %v1114
        %v1191 = vadd.f32 %v1175, %v1189
        %v1192 = vadd.f32 %v1176, %v1190
        %v1193 = vpack.c.bf16 %v1192, %v1191
        %v1194 = vld [vmem:[%s8] sm:$0xf]
        %v1195 = vld [vmem:[%s8 + $0x4] sm:$0xf]
        %v1196 = vld [vmem:[%s8 + $0x8] sm:$0xf]
        %v1197 = vld [vmem:[%s8 + $0xc] sm:$0xf]
        %v1198 = vld [vmem:[%s9] sm:$0x1]
        %v1200 = vlaneseq
        %v1201 = vshrl.u32 %v1200, 7
        %v1202 = vsub.s32 0, %v1201
        %v1203 = vrot.slane %v1198, %v1202
        %v1209 = vunpack.c.l.b16 %v1194
        %v1210 = vunpack.c.l.b16 %v1195
        %v1211 = vunpack.c.l.b16 %v1196
        %v1212 = vunpack.c.l.b16 %v1197
        %v1213 = vpack.c.b16 %v1210, %v1209
        %v1214 = vpack.c.b16 %v1212, %v1211
        %v1218 = vsel %vm580, %v1193, 0
        %1220 = vmatprep.subr.bf16.mxu0 0
        %1221 = vmatpush1.bf16.msra.mxu0 0
        %1222 = vmatprep.subr.bf16.mxu0 0
        %1223 = vmatpush1.bf16.msra.mxu0 0
        %1224 = vmatprep.subr.bf16.mxu0 0
        %1225 = vmatpush1.bf16.msra.mxu0 0
        %1226 = vmatprep.subr.bf16.mxu0 0
        %1227 = vmatpush1.bf16.msra.mxu0 0
        %1228 = vmatprep.subr.bf16.mxu0 0
        %1229 = vmatpush1.bf16.msra.mxu0 0
        %1230 = vmatprep.subr.bf16.mxu0 0
        %1231 = vmatpush1.bf16.msra.mxu0 0
        %1232 = vmatprep.subr.bf16.mxu0 0
        %1233 = vmatpush1.bf16.msra.mxu0 %v1214
        %1234 = vmatprep.subr.bf16.mxu0 0
        %1235 = vmatpush1.bf16.msra.mxu0 %v1213
        %1236 = vmatprep.subr.bf16.mxu0 0
        %1237 = vmatpush2.bf16.msra.mxu0 0
        %1238 = vmatprep.subr.bf16.mxu0 0
        %1239 = vmatpush2.bf16.msra.mxu0 0
        %1240 = vmatprep.subr.bf16.mxu0 0
        %1241 = vmatpush2.bf16.msra.mxu0 0
        %1242 = vmatprep.subr.bf16.mxu0 0
        %1243 = vmatpush2.bf16.msra.mxu0 0
        %1244 = vmatprep.subr.bf16.mxu0 0
        %1245 = vmatpush2.bf16.msra.mxu0 0
        %1246 = vmatprep.subr.bf16.mxu0 0
        %1247 = vmatpush2.bf16.msra.mxu0 0
        %1248 = vmatprep.subr.bf16.mxu0 0
        %1249 = vmatpush2.bf16.msra.mxu0 0
        %1250 = vmatprep.subr.bf16.mxu0 0
        %1251 = vmatpush2.bf16.msra.mxu0 0
        %1252 = vmatprep.mubr.bf16.mxu0 0
        %1253 = vmatmul.mubr.bf16.gmra.mxu0 %v1218
        %v1254 = vpop.f32.mrf.mxu0
        %v1255 = vadd.f32 %v1203, %v1254
        %v1256 = vpop.f32.mrf.mxu0
        %v1257 = vpop.f32.mrf.mxu0
        %v1258 = vadd.f32 %v1203, %v1257
        %v1259 = vpop.f32.mrf.mxu0
        %1260 = vdwg.mxu0
        %v1261 = vmax.f32 %v1255, 0.0
        %v1262 = vmax.f32 %v1258, 0.0
        %v1263 = vpack.c.bf16 %v1262, %v1261
        %v1264 = vld [vmem:[%s10] sm:$0xf]
        %v1265 = vld [vmem:[%s10 + $0x4] sm:$0xf]
        %v1266 = vld [vmem:[%s10 + $0x8] sm:$0xf]
        %v1267 = vld [vmem:[%s10 + $0xc] sm:$0xf]
        %v1268 = vld [vmem:[%s11] sm:$0x1]
        %v1270 = vlaneseq
        %v1271 = vshrl.u32 %v1270, 7
        %v1272 = vsub.s32 0, %v1271
        %v1273 = vrot.slane %v1268, %v1272
        %v1279 = vunpack.c.l.b16 %v1264
        %v1280 = vunpack.c.l.b16 %v1265
        %v1281 = vunpack.c.l.b16 %v1266
        %v1282 = vunpack.c.l.b16 %v1267
        %v1283 = vpack.c.b16 %v1280, %v1279
        %v1284 = vpack.c.b16 %v1282, %v1281
        %v1288 = vsel %vm580, %v1263, 0
        %1290 = vmatprep.subr.bf16.mxu0 0
        %1291 = vmatpush1.bf16.msra.mxu0 0
        %1292 = vmatprep.subr.bf16.mxu0 0
        %1293 = vmatpush1.bf16.msra.mxu0 0
        %1294 = vmatprep.subr.bf16.mxu0 0
        %1295 = vmatpush1.bf16.msra.mxu0 0
        %1296 = vmatprep.subr.bf16.mxu0 0
        %1297 = vmatpush1.bf16.msra.mxu0 0
        %1298 = vmatprep.subr.bf16.mxu0 0
        %1299 = vmatpush1.bf16.msra.mxu0 0
        %1300 = vmatprep.subr.bf16.mxu0 0
        %1301 = vmatpush1.bf16.msra.mxu0 0
        %1302 = vmatprep.subr.bf16.mxu0 0
        %1303 = vmatpush1.bf16.msra.mxu0 %v1284
        %1304 = vmatprep.subr.bf16.mxu0 0
        %1305 = vmatpush1.bf16.msra.mxu0 %v1283
        %1306 = vmatprep.subr.bf16.mxu0 0
        %1307 = vmatpush2.bf16.msra.mxu0 0
        %1308 = vmatprep.subr.bf16.mxu0 0
        %1309 = vmatpush2.bf16.msra.mxu0 0
        %1310 = vmatprep.subr.bf16.mxu0 0
        %1311 = vmatpush2.bf16.msra.mxu0 0
        %1312 = vmatprep.subr.bf16.mxu0 0
        %1313 = vmatpush2.bf16.msra.mxu0 0
        %1314 = vmatprep.subr.bf16.mxu0 0
        %1315 = vmatpush2.bf16.msra.mxu0 0
        %1316 = vmatprep.subr.bf16.mxu0 0
        %1317 = vmatpush2.bf16.msra.mxu0 0
        %1318 = vmatprep.subr.bf16.mxu0 0
        %1319 = vmatpush2.bf16.msra.mxu0 0
        %1320 = vmatprep.subr.bf16.mxu0 0
        %1321 = vmatpush2.bf16.msra.mxu0 0
        %1322 = vmatprep.mubr.bf16.mxu0 0
        %1323 = vmatmul.mubr.bf16.gmra.mxu0 %v1288
        %v1324 = vpop.f32.mrf.mxu0
        %v1325 = vadd.f32 %v1273, %v1324
        %v1326 = vpop.f32.mrf.mxu0
        %v1327 = vpop.f32.mrf.mxu0
        %v1328 = vadd.f32 %v1273, %v1327
        %v1329 = vpop.f32.mrf.mxu0
        %1330 = vdwg.mxu0
        %v1331 = vmax.f32 %v1325, 0.0
        %v1332 = vmax.f32 %v1328, 0.0
        %v1333 = vld [vmem:[%s12] sm:$0x1]
        %v1334 = vpack.c.bf16 %v1332, %v1331
        %v1335 = vld [vmem:[#allocation2] sm:$0x1]
        %1337 = vset.pattern.permute.xlu0 0
        %1338 = vperm.xlu0 %1337, %v1335
        %v1339 = vpop.permute.xlu0 %1338
        %v1341 = vlaneseq
        %v1342 = vshrl.u32 %v1341, 7
        %v1343 = vsub.s32 0, %v1342
        %v1344 = vrot.slane %v1339, %v1343
        %v1346 = vsel %vm580, %v1333, 0
        %v1349 = vsel %vm580, %v1334, 0
        %1351 = vmatprep.subr.bf16.mxu0 0
        %1352 = vmatpush1.bf16.xpose.msra.mxu0 0
        %1353 = vmatprep.subr.bf16.mxu0 0
        %1354 = vmatpush1.bf16.xpose.msra.mxu0 0
        %1355 = vmatprep.subr.bf16.mxu0 0
        %1356 = vmatpush1.bf16.xpose.msra.mxu0 0
        %1357 = vmatprep.subr.bf16.mxu0 0
        %1358 = vmatpush1.bf16.xpose.msra.mxu0 0
        %1359 = vmatprep.subr.bf16.mxu0 0
        %1360 = vmatpush1.bf16.xpose.msra.mxu0 0
        %1361 = vmatprep.subr.bf16.mxu0 0
        %1362 = vmatpush1.bf16.xpose.msra.mxu0 0
        %1363 = vmatprep.subr.bf16.mxu0 0
        %1364 = vmatpush1.bf16.xpose.msra.mxu0 0
        %1365 = vmatprep.subr.bf16.mxu0 0
        %1366 = vmatpush1.bf16.xpose.msra.mxu0 %v1349
        %1367 = vmatprep.subr.bf16.mxu0 0
        %1368 = vmatpush2.bf16.xpose.msra.mxu0 0
        %1369 = vmatprep.subr.bf16.mxu0 0
        %1370 = vmatpush2.bf16.xpose.msra.mxu0 0
        %1371 = vmatprep.subr.bf16.mxu0 0
        %1372 = vmatpush2.bf16.xpose.msra.mxu0 0
        %1373 = vmatprep.subr.bf16.mxu0 0
        %1374 = vmatpush2.bf16.xpose.msra.mxu0 0
        %1375 = vmatprep.subr.bf16.mxu0 0
        %1376 = vmatpush2.bf16.xpose.msra.mxu0 0
        %1377 = vmatprep.subr.bf16.mxu0 0
        %1378 = vmatpush2.bf16.xpose.msra.mxu0 0
        %1379 = vmatprep.subr.bf16.mxu0 0
        %1380 = vmatpush2.bf16.xpose.msra.mxu0 0
        %1381 = vmatprep.subr.bf16.mxu0 0
        %1382 = vmatpush2.bf16.xpose.msra.mxu0 0
        %1383 = vmatprep.mubr.bf16.mxu0 0
        %1384 = vmatmul.mubr.bf16.gmra.mxu0 %v1346
        %v1385 = vpop.f32.mrf.mxu0
        %v1386 = vadd.f32 %v1344, %v1385
        %v1387 = vpop.f32.mrf.mxu0
        %v1388 = vpop.f32.mrf.mxu0
        %v1389 = vpop.f32.mrf.mxu0
        %1390 = vdwg.mxu0
        %vm1391 = vcmask 122880
        %1392 = vst.msk [vmem:[%s462] sm:$0x1] %vm1391, %v1386
        %s1393 = sand.u32 %s337, 1
        %s1394 = scalar_lea.sflag [#allocation4], %s1393
        %s1395 = sand.u32 %s337, 1
        %s1396 = scalar_lea.vmem [#allocation3], %s1395
        // Predicated region
        $region77: #{pka_forward.1} parent=75 // pred_check
          %p1397 = pneg %p347
        $region78: #{pka_forward.1} parent=75 // pred_check_branch
          %1399 = sbr.rel (%p1397) target = $region80
        $region79: #{pka_forward.1} parent=75 // pred_region
          %s1401 = ssub.s32 16, 16
          %1402 = vsyncadd %s1394, %s1401
          %s1403 = smul.addr %s30, 16
          %s1404 = scalar_lea.hbm %s14, %s1403
          %s1406 = sshll.u32 %s1396, 4
          %s1407 = int_to_ptr.vmem [resolvable:$true] %s1406
          %1409 = dma.vmem_to_hbm [thread:$0]  %s1407, 16, %s1404, %s1394
        $region80: #{pka_forward.1} parent=75 // pred_fallthru
          _
      $region76: #{pka_forward.1} parent=5 // pred_fallthru
        _
      %p1410 = scmp.le.s32.totalorder 2, %s25
      // Predicated region
      $region81: #{pka_forward.1} parent=5 // pred_check
        %p1411 = pneg %p1410
      $region82: #{pka_forward.1} parent=5 // pred_check_branch
        %1413 = sbr.rel (%p1411) target = $region84
      $region83: #{pka_forward.1} parent=5 // pred_region
        %s1414 = ssub.s32 %s25, 2
        // Predicated region
        $region85: #{pka_forward.1} parent=83 // pred_check
          %p1415 = pneg %p353
        $region86: #{pka_forward.1} parent=83 // pred_check_branch
          %1417 = sbr.rel (%p1415) target = $region88
        $region87: #{pka_forward.1} parent=83 // pred_region
          %s1418 = sand.u32 %s338, 1
          %s1419 = scalar_lea.sflag [#allocation4], %s1418
          %s1420 = sand.u32 %s338, 1
          %s1421 = scalar_lea.vmem [#allocation3], %s1420
          %1422 = dma.done %s1419, 16
        $region88: #{pka_forward.1} parent=83 // pred_fallthru
          _
      $region84: #{pka_forward.1} parent=5 // pred_fallthru
        _
    $region6: #{pka_forward.1} parent=1 // loop_footer
      %s29 = sadd.s32 1, %s25
    $region7: #{pka_forward.1} parent=1 // loop_footer_branch
      %24 = sbr.rel target = $region3
    $region8: #{pka_forward.1} parent=1 // loop_exit
      _
    %1423 = vsyncpa [#allocation4], 1
    %s1424 = scalar_lea.sflag [#allocation4], 1
    %1425 = vsyncpa %s1424, 1

</llo_original>
